<compile_context>
chip_gen: v5e
topology: v5e:2x2
jax: 0.10.0
libtpu: 0.0.40
codegen_flags: <defaults>
</compile_context>

<pallas_src>
import functools

import jax
import jax.numpy as jnp
from jax.experimental import pallas as pl
from jax.experimental.pallas import tpu as pltpu

LN_EPS = 1e-5  # nn.LayerNorm default


def _layernorm_f32(v, g, b):
    mu = jnp.mean(v, axis=-1, keepdims=True)
    var = jnp.mean(jnp.square(v - mu), axis=-1, keepdims=True)
    return (v - mu) * jax.lax.rsqrt(var + LN_EPS) * g + b


def resblock_kernel(x_ref, g1_ref, b1_ref, win_ref, bin_ref, wout_ref, bout_ref,
                    g2_ref, b2_ref, wfc_ref, bfc_ref, wpr_ref, bpr_ref,
                    xo_ref, qo_ref, ko_ref, vo_ref, *, n_head):
    # One grid step = one batch element.  x block: (1, L, D); weights are whole
    # arrays resident in VMEM (single-buffered).
    x = x_ref[0].astype(jnp.float32)                      # (L, D)
    L, D = x.shape
    dh = D // n_head
    scale = float(dh) ** -0.5

    # ---- ln_1 (fp32 statistics) ----
    ln1 = _layernorm_f32(x, g1_ref[...], b1_ref[...])     # (L, D) fp32

    # ---- fused qkv projection: bf16 operands on the MXU, fp32 accumulation ----
    qkv = jnp.dot(ln1.astype(jnp.bfloat16), win_ref[...],
                  preferred_element_type=jnp.float32) + bin_ref[...]     # (L, 3D) fp32
    q_p = qkv[:, 0 * D:1 * D]
    k_p = qkv[:, 1 * D:2 * D]
    v_p = qkv[:, 2 * D:3 * D]

    w_out = wout_ref[...]                                 # (D, D) bf16  = out_proj.weight^T
    b_out = bout_ref[...]                                 # (1, D) fp32

    # ---- extra q/k/v outputs: out_proj applied to each raw projection.
    #      q/k are stored immediately to cut live ranges; v still needs +x2. ----
    qo_ref[0] = (jnp.dot(q_p.astype(jnp.bfloat16), w_out,
                         preferred_element_type=jnp.float32) + b_out).astype(qo_ref.dtype)
    ko_ref[0] = (jnp.dot(k_p.astype(jnp.bfloat16), w_out,
                         preferred_element_type=jnp.float32) + b_out).astype(ko_ref.dtype)
    v_out = jnp.dot(v_p.astype(jnp.bfloat16), w_out,
                    preferred_element_type=jnp.float32) + b_out

    # ---- multi-head self-attention, batched over heads (no per-head Python loop) ----
    def to_heads(t):                                      # (L, D) -> (H, L, dh) bf16
        return t.astype(jnp.bfloat16).reshape(L, n_head, dh).transpose(1, 0, 2)

    qh = to_heads(q_p * scale)
    kh = to_heads(k_p)
    vh = to_heads(v_p)
    # TODO(synk): on v6e/v7x, packing 2-4 heads per contraction (dh=64 -> 128/256)
    #             would fill the 256-wide MXU better; not done to keep exact semantics simple.
    s = jnp.einsum('hqd,hkd->hqk', qh, kh,
                   preferred_element_type=jnp.float32)    # (H, L, L) fp32
    s = s - jnp.max(s, axis=-1, keepdims=True)
    p = jnp.exp(s)                                        # softmax in fp32
    p = p * pl.reciprocal(jnp.sum(p, axis=-1, keepdims=True), approx=True)
    ctx = jnp.einsum('hqk,hkd->hqd', p.astype(jnp.bfloat16), vh,
                     preferred_element_type=jnp.float32)  # (H, L, dh) fp32
    ctx = ctx.transpose(1, 0, 2).reshape(L, D)

    attn_out = jnp.dot(ctx.astype(jnp.bfloat16), w_out,
                       preferred_element_type=jnp.float32) + b_out
    x1 = x + attn_out                                     # x = x + attention(ln_1(x))

    # ---- MLP with QuickGELU (elementwise math in fp32) ----
    ln2 = _layernorm_f32(x1, g2_ref[...], b2_ref[...])
    hdn = jnp.dot(ln2.astype(jnp.bfloat16), wfc_ref[...],
                  preferred_element_type=jnp.float32) + bfc_ref[...]
    hdn = hdn * jax.nn.sigmoid(1.702 * hdn)               # QuickGELU
    mlp_out = jnp.dot(hdn.astype(jnp.bfloat16), wpr_ref[...],
                      preferred_element_type=jnp.float32) + bpr_ref[...]
    x2 = x1 + mlp_out                                     # x = x + mlp(ln_2(x))

    xo_ref[0] = x2.astype(xo_ref.dtype)
    vo_ref[0] = (v_out + x2).astype(vo_ref.dtype)         # v = v + x


@functools.lru_cache(maxsize=None)
def _vmem_limit_bytes():
    # Raise the scoped-VMEM limit above the 16/32 MiB defaults, staying below the
    # chip's physical VMEM (64 MiB/TC on v7x, 128 MiB on v5e/v6e).
    try:
        cap = int(pltpu.get_tpu_info().vmem_capacity_bytes)
    except Exception:
        cap = 128 * 1024 * 1024
    return max(32 * 1024 * 1024, min(100 * 1024 * 1024, cap - 16 * 1024 * 1024))


def residual_attention_block(x_nld, p, n_head):
    N, L, D = x_nld.shape
    assert D % n_head == 0

    # Whole-array single-buffered VMEM residency for weights/biases: they are reused
    # identically at every grid step, so there is no point double-buffering them.
    wspec = pl.BlockSpec(memory_space=pltpu.MemorySpace.VMEM)
    batch_spec = pl.BlockSpec((1, L, D), lambda n: (n, 0, 0))
    out_sds = jax.ShapeDtypeStruct((N, L, D), x_nld.dtype)
    kernel = functools.partial(resblock_kernel, n_head=n_head)

    # TODO(synk): for very small N on v7x add a second parallel grid axis (split L or
    #             heads) so both TensorCores are busy; for D >= ~1536 on v7x, tile
    #             wfc/wpr over the 4*D hidden dim with pl.Buffered(2) to fit 64 MiB VMEM.
    return pl.pallas_call(
        kernel,
        grid=(N,),
        in_specs=[batch_spec] + [wspec] * 12,
        out_specs=(batch_spec, batch_spec, batch_spec, batch_spec),
        out_shape=(out_sds, out_sds, out_sds, out_sds),
        compiler_params=pltpu.CompilerParams(
            dimension_semantics=("parallel",),            # megacore: shard batch across TCs
            vmem_limit_bytes=_vmem_limit_bytes(),
        ),
    )(x_nld, p["g1"], p["b1"], p["win_t"], p["bin"], p["wout_t"], p["bout"],
      p["g2"], p["b2"], p["wfc_t"], p["bfc"], p["wpr_t"], p["bpr"])


def prepare_layer_params(p):
    """PyTorch-layout fp32 params -> kernel layout (transposed weights, bf16 matrices)."""
    row = lambda v: v.reshape(1, -1).astype(jnp.float32)
    bf = jnp.bfloat16
    return {
        "g1": row(p["ln1_g"]), "b1": row(p["ln1_b"]),
        "win_t": p["w_in"].T.astype(bf),      # in_proj_weight^T   (D, 3D)
        "bin": row(p["b_in"]),
        "wout_t": p["w_out"].T.astype(bf),    # out_proj.weight^T  (D, D)
        "bout": row(p["b_out"]),
        "g2": row(p["ln2_g"]), "b2": row(p["ln2_b"]),
        "wfc_t": p["w_fc"].T.astype(bf),      # c_fc.weight^T      (D, 4D)
        "bfc": row(p["b_fc"]),
        "wpr_t": p["w_pr"].T.astype(bf),      # c_proj.weight^T    (4D, D)
        "bpr": row(p["b_pr"]),
    }


def transformer_forward(x_lnd, layer_params, n_head, feature_layer=None):
    """x_lnd: (L, N, D) seq-first, like the PyTorch module (batch_first=False MHA)."""
    x = jnp.transpose(x_lnd, (1, 0, 2))       # -> (N, L, D) for the kernel
    kparams = [prepare_layer_params(p) for p in layer_params]
    q = k = v = None
    for i, p in enumerate(kparams):
        x, q, k, v = residual_attention_block(x, p, n_head)
        # Matches the PyTorch truthiness check (`if feature_layer and i == feature_layer`),
        # so feature_layer=0 never early-returns, exactly like the original module.
        if feature_layer and i == feature_layer:
            break
    back = lambda t: jnp.transpose(t, (1, 0, 2))
    return back(x), back(q), back(k), back(v)


def init_layer_params(key, width):
    """PyTorch-layout fp32 parameters for one ResidualAttentionBlock."""
    D = width
    ks = jax.random.split(key, 8)
    nrm = lambda k, shape, s=0.02: (s * jax.random.normal(k, shape)).astype(jnp.float32)
    return {
        "ln1_g": jnp.ones((D,), jnp.float32), "ln1_b": jnp.zeros((D,), jnp.float32),
        "w_in": nrm(ks[0], (3 * D, D)), "b_in": nrm(ks[1], (3 * D,)),
        "w_out": nrm(ks[2], (D, D)), "b_out": nrm(ks[3], (D,)),
        "ln2_g": jnp.ones((D,), jnp.float32), "ln2_b": jnp.zeros((D,), jnp.float32),
        "w_fc": nrm(ks[4], (4 * D, D)), "b_fc": nrm(ks[5], (4 * D,)),
        "w_pr": nrm(ks[6], (D, 4 * D)), "b_pr": nrm(ks[7], (D,)),
    }


# --- pure-JAX fp32 reference of one ResidualAttentionBlock (batch-first) ---
def reference_block(x_nld, p, n_head):
    N, L, D = x_nld.shape
    dh = D // n_head

    def ln(v, g, b):
        mu = v.mean(-1, keepdims=True)
        var = ((v - mu) ** 2).mean(-1, keepdims=True)
        return (v - mu) / jnp.sqrt(var + LN_EPS) * g + b

    ln1 = ln(x_nld, p["ln1_g"], p["ln1_b"])
    qkv = ln1 @ p["w_in"].T + p["b_in"]
    q_p, k_p, v_p = jnp.split(qkv, 3, axis=-1)
    q_o = q_p @ p["w_out"].T + p["b_out"]
    k_o = k_p @ p["w_out"].T + p["b_out"]
    v_o = v_p @ p["w_out"].T + p["b_out"]

    def heads(t):
        return t.reshape(N, L, n_head, dh).transpose(0, 2, 1, 3)

    qh, kh, vh = heads(q_p) * (dh ** -0.5), heads(k_p), heads(v_p)
    s = jnp.einsum('nhld,nhmd->nhlm', qh, kh)
    a = jax.nn.softmax(s, axis=-1)
    ctx = jnp.einsum('nhlm,nhmd->nhld', a, vh).transpose(0, 2, 1, 3).reshape(N, L, D)
    x1 = x_nld + ctx @ p["w_out"].T + p["b_out"]
    ln2 = ln(x1, p["ln2_g"], p["ln2_b"])
    h = ln2 @ p["w_fc"].T + p["b_fc"]
    h = h * jax.nn.sigmoid(1.702 * h)
    x2 = x1 + h @ p["w_pr"].T + p["b_pr"]
    return x2, q_o, k_o, v_o + x2


if __name__ == "__main__":
    width, layers, heads = 32, 2, 4
    L, N = 8, 2

    key = jax.random.PRNGKey(0)
    kx, kp = jax.random.split(key)
    x = jax.random.normal(kx, (L, N, width), jnp.float32)     # seq-first, like PyTorch MHA
    params = [init_layer_params(k, width) for k in jax.random.split(kp, layers)]

    out = transformer_forward(x, params, heads)
    out = jax.block_until_ready(out)

    # validate against the pure-fp32 reference (kernel runs bf16 matmuls, fp32 accum)
    xr = jnp.transpose(x, (1, 0, 2))
    qr = kr = vr = None
    for p in params:
        xr, qr, kr, vr = reference_block(xr, p, heads)
    ref = tuple(jnp.transpose(t, (1, 0, 2)) for t in (xr, qr, kr, vr))
    for name, got, want in zip(("x", "q", "k", "v"), out, ref):
        assert got.shape == (L, N, width)
        err = float(jnp.max(jnp.abs(got - want)))
        assert jnp.allclose(got, want, atol=1e-2, rtol=1e-2), (name, err)

    print("KERNEL_OK")
</pallas_src>

<mosaic_0001>
module attributes {stable_mosaic.version = 11 : i64} {
  func.func @resblock_kernel(%arg0: i32, %arg1: memref<1x8x32xf32, #tpu.memory_space<vmem>>, %arg2: memref<1x32xf32, #tpu.memory_space<vmem>>, %arg3: memref<1x32xf32, #tpu.memory_space<vmem>>, %arg4: memref<32x96xbf16, #tpu.memory_space<vmem>>, %arg5: memref<1x96xf32, #tpu.memory_space<vmem>>, %arg6: memref<32x32xbf16, #tpu.memory_space<vmem>>, %arg7: memref<1x32xf32, #tpu.memory_space<vmem>>, %arg8: memref<1x32xf32, #tpu.memory_space<vmem>>, %arg9: memref<1x32xf32, #tpu.memory_space<vmem>>, %arg10: memref<32x128xbf16, #tpu.memory_space<vmem>>, %arg11: memref<1x128xf32, #tpu.memory_space<vmem>>, %arg12: memref<128x32xbf16, #tpu.memory_space<vmem>>, %arg13: memref<1x32xf32, #tpu.memory_space<vmem>>, %arg14: memref<1x8x32xf32, #tpu.memory_space<vmem>>, %arg15: memref<1x8x32xf32, #tpu.memory_space<vmem>>, %arg16: memref<1x8x32xf32, #tpu.memory_space<vmem>>, %arg17: memref<1x8x32xf32, #tpu.memory_space<vmem>>) attributes {dimension_semantics = [#tpu.dimension_semantics<parallel>], iteration_bounds = array<i64: 2>, scalar_prefetch = 0 : i64, scratch_operands = 0 : i64, tpu.core_type = #tpu.core_type<tc>, window_params = [{transform_indices = @transform_0, window_bounds = array<i64: 1, 8, 32>}, {pipeline_mode = #tpu.pipeline_mode<synchronous>, transform_indices = @transform_1, window_bounds = array<i64: 1, 32>}, {pipeline_mode = #tpu.pipeline_mode<synchronous>, transform_indices = @transform_2, window_bounds = array<i64: 1, 32>}, {pipeline_mode = #tpu.pipeline_mode<synchronous>, transform_indices = @transform_3, window_bounds = array<i64: 32, 96>}, {pipeline_mode = #tpu.pipeline_mode<synchronous>, transform_indices = @transform_4, window_bounds = array<i64: 1, 96>}, {pipeline_mode = #tpu.pipeline_mode<synchronous>, transform_indices = @transform_5, window_bounds = array<i64: 32, 32>}, {pipeline_mode = #tpu.pipeline_mode<synchronous>, transform_indices = @transform_6, window_bounds = array<i64: 1, 32>}, {pipeline_mode = #tpu.pipeline_mode<synchronous>, transform_indices = @transform_7, window_bounds = array<i64: 1, 32>}, {pipeline_mode = #tpu.pipeline_mode<synchronous>, transform_indices = @transform_8, window_bounds = array<i64: 1, 32>}, {pipeline_mode = #tpu.pipeline_mode<synchronous>, transform_indices = @transform_9, window_bounds = array<i64: 32, 128>}, {pipeline_mode = #tpu.pipeline_mode<synchronous>, transform_indices = @transform_10, window_bounds = array<i64: 1, 128>}, {pipeline_mode = #tpu.pipeline_mode<synchronous>, transform_indices = @transform_11, window_bounds = array<i64: 128, 32>}, {pipeline_mode = #tpu.pipeline_mode<synchronous>, transform_indices = @transform_12, window_bounds = array<i64: 1, 32>}, {transform_indices = @transform_13, window_bounds = array<i64: 1, 8, 32>}, {transform_indices = @transform_14, window_bounds = array<i64: 1, 8, 32>}, {transform_indices = @transform_15, window_bounds = array<i64: 1, 8, 32>}, {transform_indices = @transform_16, window_bounds = array<i64: 1, 8, 32>}]} {
    %c0 = arith.constant 0 : index
    %c0_0 = arith.constant 0 : index
    %c0_1 = arith.constant 0 : index
    %0 = vector.load %arg1[%c0, %c0_0, %c0_1] : memref<1x8x32xf32, #tpu.memory_space<vmem>>, vector<1x8x32xf32>
    %1 = vector.shape_cast %0 : vector<1x8x32xf32> to vector<8x32xf32>
    %c0_2 = arith.constant 0 : index
    %c0_3 = arith.constant 0 : index
    %2 = vector.load %arg2[%c0_2, %c0_3] : memref<1x32xf32, #tpu.memory_space<vmem>>, vector<1x32xf32>
    %c0_4 = arith.constant 0 : index
    %c0_5 = arith.constant 0 : index
    %3 = vector.load %arg3[%c0_4, %c0_5] : memref<1x32xf32, #tpu.memory_space<vmem>>, vector<1x32xf32>
    %cst = arith.constant dense<0.000000e+00> : vector<8xf32>
    %4 = vector.multi_reduction <add>, %1, %cst [1] : vector<8x32xf32> to vector<8xf32>
    %5 = vector.shape_cast %4 : vector<8xf32> to vector<8x1xf32>
    %cst_6 = arith.constant 3.200000e+01 : f32
    %6 = vector.broadcast %cst_6 : f32 to vector<8x1xf32>
    %7 = arith.divf %5, %6 : vector<8x1xf32>
    %8 = vector.broadcast %7 : vector<8x1xf32> to vector<8x32xf32>
    %9 = arith.subf %1, %8 : vector<8x32xf32>
    %10 = arith.mulf %9, %9 : vector<8x32xf32>
    %cst_7 = arith.constant dense<0.000000e+00> : vector<8xf32>
    %11 = vector.multi_reduction <add>, %10, %cst_7 [1] : vector<8x32xf32> to vector<8xf32>
    %12 = vector.shape_cast %11 : vector<8xf32> to vector<8x1xf32>
    %cst_8 = arith.constant 3.200000e+01 : f32
    %13 = vector.broadcast %cst_8 : f32 to vector<8x1xf32>
    %14 = arith.divf %12, %13 : vector<8x1xf32>
    %15 = vector.broadcast %7 : vector<8x1xf32> to vector<8x32xf32>
    %16 = arith.subf %1, %15 : vector<8x32xf32>
    %cst_9 = arith.constant 9.99999974E-6 : f32
    %17 = vector.broadcast %cst_9 : f32 to vector<8x1xf32>
    %18 = arith.addf %14, %17 : vector<8x1xf32>
    %19 = math.rsqrt %18 : vector<8x1xf32>
    %20 = vector.broadcast %19 : vector<8x1xf32> to vector<8x32xf32>
    %21 = arith.mulf %16, %20 : vector<8x32xf32>
    %22 = vector.broadcast %2 : vector<1x32xf32> to vector<8x32xf32>
    %23 = arith.mulf %21, %22 : vector<8x32xf32>
    %24 = vector.broadcast %3 : vector<1x32xf32> to vector<8x32xf32>
    %25 = arith.addf %23, %24 : vector<8x32xf32>
    %26 = arith.truncf %25 : vector<8x32xf32> to vector<8x32xbf16>
    %c0_10 = arith.constant 0 : index
    %c0_11 = arith.constant 0 : index
    %27 = vector.load %arg4[%c0_10, %c0_11] : memref<32x96xbf16, #tpu.memory_space<vmem>>, vector<32x96xbf16>
    %cst_12 = arith.constant dense<0.000000e+00> : vector<8x96xf32>
    %28 = tpu.matmul %26, %27, %cst_12 {dimension_numbers = #tpu.dot_dimension_numbers<[1], [0], [0], [1], [0, 0, 1, 1], [], []>} : vector<8x32xbf16>, vector<32x96xbf16>, vector<8x96xf32> -> vector<8x96xf32>
    %c0_13 = arith.constant 0 : index
    %c0_14 = arith.constant 0 : index
    %29 = vector.load %arg5[%c0_13, %c0_14] : memref<1x96xf32, #tpu.memory_space<vmem>>, vector<1x96xf32>
    %30 = vector.broadcast %29 : vector<1x96xf32> to vector<8x96xf32>
    %31 = arith.addf %28, %30 : vector<8x96xf32>
    %32 = vector.extract_strided_slice %31 {offsets = [0, 0], sizes = [8, 32], strides = [1, 1]} : vector<8x96xf32> to vector<8x32xf32>
    %33 = vector.extract_strided_slice %31 {offsets = [0, 32], sizes = [8, 32], strides = [1, 1]} : vector<8x96xf32> to vector<8x32xf32>
    %34 = vector.extract_strided_slice %31 {offsets = [0, 64], sizes = [8, 32], strides = [1, 1]} : vector<8x96xf32> to vector<8x32xf32>
    %c0_15 = arith.constant 0 : index
    %c0_16 = arith.constant 0 : index
    %35 = vector.load %arg6[%c0_15, %c0_16] : memref<32x32xbf16, #tpu.memory_space<vmem>>, vector<32x32xbf16>
    %c0_17 = arith.constant 0 : index
    %c0_18 = arith.constant 0 : index
    %36 = vector.load %arg7[%c0_17, %c0_18] : memref<1x32xf32, #tpu.memory_space<vmem>>, vector<1x32xf32>
    %37 = arith.truncf %32 : vector<8x32xf32> to vector<8x32xbf16>
    %cst_19 = arith.constant dense<0.000000e+00> : vector<8x32xf32>
    %38 = tpu.matmul %37, %35, %cst_19 {dimension_numbers = #tpu.dot_dimension_numbers<[1], [0], [0], [1], [0, 0, 1, 1], [], []>} : vector<8x32xbf16>, vector<32x32xbf16>, vector<8x32xf32> -> vector<8x32xf32>
    %39 = vector.broadcast %36 : vector<1x32xf32> to vector<8x32xf32>
    %40 = arith.addf %38, %39 : vector<8x32xf32>
    %c0_20 = arith.constant 0 : index
    %c0_21 = arith.constant 0 : index
    %c0_22 = arith.constant 0 : index
    %41 = vector.load %arg15[%c0_20, %c0_21, %c0_22] : memref<1x8x32xf32, #tpu.memory_space<vmem>>, vector<1x8x32xf32>
    %42 = vector.shape_cast %41 : vector<1x8x32xf32> to vector<8x32xf32>
    %43 = vector.shape_cast %40 : vector<8x32xf32> to vector<1x8x32xf32>
    tpu.vector_store %arg15[%c0_20, %c0_21, %c0_22], %43 {strides = array<i32>} : memref<1x8x32xf32, #tpu.memory_space<vmem>>, vector<1x8x32xf32>,
    %44 = arith.truncf %33 : vector<8x32xf32> to vector<8x32xbf16>
    %cst_23 = arith.constant dense<0.000000e+00> : vector<8x32xf32>
    %45 = tpu.matmul %44, %35, %cst_23 {dimension_numbers = #tpu.dot_dimension_numbers<[1], [0], [0], [1], [0, 0, 1, 1], [], []>} : vector<8x32xbf16>, vector<32x32xbf16>, vector<8x32xf32> -> vector<8x32xf32>
    %46 = vector.broadcast %36 : vector<1x32xf32> to vector<8x32xf32>
    %47 = arith.addf %45, %46 : vector<8x32xf32>
    %c0_24 = arith.constant 0 : index
    %c0_25 = arith.constant 0 : index
    %c0_26 = arith.constant 0 : index
    %48 = vector.load %arg16[%c0_24, %c0_25, %c0_26] : memref<1x8x32xf32, #tpu.memory_space<vmem>>, vector<1x8x32xf32>
    %49 = vector.shape_cast %48 : vector<1x8x32xf32> to vector<8x32xf32>
    %50 = vector.shape_cast %47 : vector<8x32xf32> to vector<1x8x32xf32>
    tpu.vector_store %arg16[%c0_24, %c0_25, %c0_26], %50 {strides = array<i32>} : memref<1x8x32xf32, #tpu.memory_space<vmem>>, vector<1x8x32xf32>,
    %51 = arith.truncf %34 : vector<8x32xf32> to vector<8x32xbf16>
    %cst_27 = arith.constant dense<0.000000e+00> : vector<8x32xf32>
    %52 = tpu.matmul %51, %35, %cst_27 {dimension_numbers = #tpu.dot_dimension_numbers<[1], [0], [0], [1], [0, 0, 1, 1], [], []>} : vector<8x32xbf16>, vector<32x32xbf16>, vector<8x32xf32> -> vector<8x32xf32>
    %53 = vector.broadcast %36 : vector<1x32xf32> to vector<8x32xf32>
    %54 = arith.addf %52, %53 : vector<8x32xf32>
    %cst_28 = arith.constant 0.353553385 : f32
    %55 = vector.broadcast %cst_28 : f32 to vector<8x32xf32>
    %56 = arith.mulf %32, %55 : vector<8x32xf32>
    %57 = arith.truncf %56 : vector<8x32xf32> to vector<8x32xbf16>
    %58 = vector.shape_cast %57 : vector<8x32xbf16> to vector<8x4x8xbf16>
    %59 = tpu.transpose %58, [1, 0, 2] : vector<8x4x8xbf16> -> vector<4x8x8xbf16>
    %60 = arith.truncf %33 : vector<8x32xf32> to vector<8x32xbf16>
    %61 = vector.shape_cast %60 : vector<8x32xbf16> to vector<8x4x8xbf16>
    %62 = tpu.transpose %61, [1, 0, 2] : vector<8x4x8xbf16> -> vector<4x8x8xbf16>
    %63 = arith.truncf %34 : vector<8x32xf32> to vector<8x32xbf16>
    %64 = vector.shape_cast %63 : vector<8x32xbf16> to vector<8x4x8xbf16>
    %65 = tpu.transpose %64, [1, 0, 2] : vector<8x4x8xbf16> -> vector<4x8x8xbf16>
    "tpu.trace_start"() <{level = 10 : i32, message = "hqd,hkd->hqk"}> : () -> ()
    %cst_29 = arith.constant dense<0.000000e+00> : vector<4x8x8xf32>
    %66 = tpu.matmul %59, %62, %cst_29 {dimension_numbers = #tpu.dot_dimension_numbers<[2], [2], [1], [1], [0, 0, 0, 1, 1, 1], [0], [0]>} : vector<4x8x8xbf16>, vector<4x8x8xbf16>, vector<4x8x8xf32> -> vector<4x8x8xf32>
    "tpu.trace_stop"() : () -> ()
    %cst_30 = arith.constant dense<0xFF800000> : vector<4x8xf32>
    %67 = vector.multi_reduction <maximumf>, %66, %cst_30 [2] : vector<4x8x8xf32> to vector<4x8xf32>
    %68 = vector.shape_cast %67 : vector<4x8xf32> to vector<4x8x1xf32>
    %69 = vector.broadcast %68 : vector<4x8x1xf32> to vector<4x8x8xf32>
    %70 = arith.subf %66, %69 : vector<4x8x8xf32>
    %71 = math.exp %70 : vector<4x8x8xf32>
    %cst_31 = arith.constant dense<0.000000e+00> : vector<4x8xf32>
    %72 = vector.multi_reduction <add>, %71, %cst_31 [2] : vector<4x8x8xf32> to vector<4x8xf32>
    %73 = vector.shape_cast %72 : vector<4x8xf32> to vector<4x8x1xf32>
    %74 = tpu.reciprocal %73 {approx = true} : vector<4x8x1xf32> -> vector<4x8x1xf32>
    %75 = vector.broadcast %74 : vector<4x8x1xf32> to vector<4x8x8xf32>
    %76 = arith.mulf %71, %75 : vector<4x8x8xf32>
    %77 = arith.truncf %76 : vector<4x8x8xf32> to vector<4x8x8xbf16>
    "tpu.trace_start"() <{level = 10 : i32, message = "hqk,hkd->hqd"}> : () -> ()
    %cst_32 = arith.constant dense<0.000000e+00> : vector<4x8x8xf32>
    %78 = tpu.matmul %77, %65, %cst_32 {dimension_numbers = #tpu.dot_dimension_numbers<[2], [1], [1], [2], [0, 0, 0, 1, 1, 2], [0], [0]>} : vector<4x8x8xbf16>, vector<4x8x8xbf16>, vector<4x8x8xf32> -> vector<4x8x8xf32>
    "tpu.trace_stop"() : () -> ()
    %79 = tpu.transpose %78, [1, 0, 2] : vector<4x8x8xf32> -> vector<8x4x8xf32>
    %80 = vector.shape_cast %79 : vector<8x4x8xf32> to vector<8x32xf32>
    %81 = arith.truncf %80 : vector<8x32xf32> to vector<8x32xbf16>
    %cst_33 = arith.constant dense<0.000000e+00> : vector<8x32xf32>
    %82 = tpu.matmul %81, %35, %cst_33 {dimension_numbers = #tpu.dot_dimension_numbers<[1], [0], [0], [1], [0, 0, 1, 1], [], []>} : vector<8x32xbf16>, vector<32x32xbf16>, vector<8x32xf32> -> vector<8x32xf32>
    %83 = vector.broadcast %36 : vector<1x32xf32> to vector<8x32xf32>
    %84 = arith.addf %82, %83 : vector<8x32xf32>
    %85 = arith.addf %1, %84 : vector<8x32xf32>
    %c0_34 = arith.constant 0 : index
    %c0_35 = arith.constant 0 : index
    %86 = vector.load %arg8[%c0_34, %c0_35] : memref<1x32xf32, #tpu.memory_space<vmem>>, vector<1x32xf32>
    %c0_36 = arith.constant 0 : index
    %c0_37 = arith.constant 0 : index
    %87 = vector.load %arg9[%c0_36, %c0_37] : memref<1x32xf32, #tpu.memory_space<vmem>>, vector<1x32xf32>
    %cst_38 = arith.constant dense<0.000000e+00> : vector<8xf32>
    %88 = vector.multi_reduction <add>, %85, %cst_38 [1] : vector<8x32xf32> to vector<8xf32>
    %89 = vector.shape_cast %88 : vector<8xf32> to vector<8x1xf32>
    %cst_39 = arith.constant 3.200000e+01 : f32
    %90 = vector.broadcast %cst_39 : f32 to vector<8x1xf32>
    %91 = arith.divf %89, %90 : vector<8x1xf32>
    %92 = vector.broadcast %91 : vector<8x1xf32> to vector<8x32xf32>
    %93 = arith.subf %85, %92 : vector<8x32xf32>
    %94 = arith.mulf %93, %93 : vector<8x32xf32>
    %cst_40 = arith.constant dense<0.000000e+00> : vector<8xf32>
    %95 = vector.multi_reduction <add>, %94, %cst_40 [1] : vector<8x32xf32> to vector<8xf32>
    %96 = vector.shape_cast %95 : vector<8xf32> to vector<8x1xf32>
    %cst_41 = arith.constant 3.200000e+01 : f32
    %97 = vector.broadcast %cst_41 : f32 to vector<8x1xf32>
    %98 = arith.divf %96, %97 : vector<8x1xf32>
    %99 = vector.broadcast %91 : vector<8x1xf32> to vector<8x32xf32>
    %100 = arith.subf %85, %99 : vector<8x32xf32>
    %cst_42 = arith.constant 9.99999974E-6 : f32
    %101 = vector.broadcast %cst_42 : f32 to vector<8x1xf32>
    %102 = arith.addf %98, %101 : vector<8x1xf32>
    %103 = math.rsqrt %102 : vector<8x1xf32>
    %104 = vector.broadcast %103 : vector<8x1xf32> to vector<8x32xf32>
    %105 = arith.mulf %100, %104 : vector<8x32xf32>
    %106 = vector.broadcast %86 : vector<1x32xf32> to vector<8x32xf32>
    %107 = arith.mulf %105, %106 : vector<8x32xf32>
    %108 = vector.broadcast %87 : vector<1x32xf32> to vector<8x32xf32>
    %109 = arith.addf %107, %108 : vector<8x32xf32>
    %110 = arith.truncf %109 : vector<8x32xf32> to vector<8x32xbf16>
    %c0_43 = arith.constant 0 : index
    %c0_44 = arith.constant 0 : index
    %111 = vector.load %arg10[%c0_43, %c0_44] : memref<32x128xbf16, #tpu.memory_space<vmem>>, vector<32x128xbf16>
    %cst_45 = arith.constant dense<0.000000e+00> : vector<8x128xf32>
    %112 = tpu.matmul %110, %111, %cst_45 {dimension_numbers = #tpu.dot_dimension_numbers<[1], [0], [0], [1], [0, 0, 1, 1], [], []>} : vector<8x32xbf16>, vector<32x128xbf16>, vector<8x128xf32> -> vector<8x128xf32>
    %c0_46 = arith.constant 0 : index
    %c0_47 = arith.constant 0 : index
    %113 = vector.load %arg11[%c0_46, %c0_47] : memref<1x128xf32, #tpu.memory_space<vmem>>, vector<1x128xf32>
    %114 = vector.broadcast %113 : vector<1x128xf32> to vector<8x128xf32>
    %115 = arith.addf %112, %114 : vector<8x128xf32>
    %cst_48 = arith.constant 1.702000e+00 : f32
    %116 = vector.broadcast %cst_48 : f32 to vector<8x128xf32>
    %117 = arith.mulf %116, %115 : vector<8x128xf32>
    %118 = arith.negf %117 : vector<8x128xf32>
    %119 = math.exp %118 : vector<8x128xf32>
    %cst_49 = arith.constant 1.000000e+00 : f32
    %120 = vector.broadcast %cst_49 : f32 to vector<8x128xf32>
    %121 = arith.addf %120, %119 : vector<8x128xf32>
    %122 = arith.divf %120, %121 : vector<8x128xf32>
    %123 = arith.mulf %115, %122 : vector<8x128xf32>
    %124 = arith.truncf %123 : vector<8x128xf32> to vector<8x128xbf16>
    %c0_50 = arith.constant 0 : index
    %c0_51 = arith.constant 0 : index
    %125 = vector.load %arg12[%c0_50, %c0_51] : memref<128x32xbf16, #tpu.memory_space<vmem>>, vector<128x32xbf16>
    %cst_52 = arith.constant dense<0.000000e+00> : vector<8x32xf32>
    %126 = tpu.matmul %124, %125, %cst_52 {dimension_numbers = #tpu.dot_dimension_numbers<[1], [0], [0], [1], [0, 0, 1, 1], [], []>} : vector<8x128xbf16>, vector<128x32xbf16>, vector<8x32xf32> -> vector<8x32xf32>
    %c0_53 = arith.constant 0 : index
    %c0_54 = arith.constant 0 : index
    %127 = vector.load %arg13[%c0_53, %c0_54] : memref<1x32xf32, #tpu.memory_space<vmem>>, vector<1x32xf32>
    %128 = vector.broadcast %127 : vector<1x32xf32> to vector<8x32xf32>
    %129 = arith.addf %126, %128 : vector<8x32xf32>
    %130 = arith.addf %85, %129 : vector<8x32xf32>
    %c0_55 = arith.constant 0 : index
    %c0_56 = arith.constant 0 : index
    %c0_57 = arith.constant 0 : index
    %131 = vector.load %arg14[%c0_55, %c0_56, %c0_57] : memref<1x8x32xf32, #tpu.memory_space<vmem>>, vector<1x8x32xf32>
    %132 = vector.shape_cast %131 : vector<1x8x32xf32> to vector<8x32xf32>
    %133 = vector.shape_cast %130 : vector<8x32xf32> to vector<1x8x32xf32>
    tpu.vector_store %arg14[%c0_55, %c0_56, %c0_57], %133 {strides = array<i32>} : memref<1x8x32xf32, #tpu.memory_space<vmem>>, vector<1x8x32xf32>,
    %134 = arith.addf %54, %130 : vector<8x32xf32>
    %c0_58 = arith.constant 0 : index
    %c0_59 = arith.constant 0 : index
    %c0_60 = arith.constant 0 : index
    %135 = vector.load %arg17[%c0_58, %c0_59, %c0_60] : memref<1x8x32xf32, #tpu.memory_space<vmem>>, vector<1x8x32xf32>
    %136 = vector.shape_cast %135 : vector<1x8x32xf32> to vector<8x32xf32>
    %137 = vector.shape_cast %134 : vector<8x32xf32> to vector<1x8x32xf32>
    tpu.vector_store %arg17[%c0_58, %c0_59, %c0_60], %137 {strides = array<i32>} : memref<1x8x32xf32, #tpu.memory_space<vmem>>, vector<1x8x32xf32>,
    return
  }
  func.func @transform_0(%arg0: i32) -> (i32, i32, i32) {
    %c0_i32 = arith.constant 0 : i32
    %c0_i32_0 = arith.constant 0 : i32
    %c0_i32_1 = arith.constant 0 : i32
    return %arg0, %c0_i32, %c0_i32_0 : i32, i32, i32
  }
  func.func @transform_1(%arg0: i32) -> (i32, i32) {
    %c0_i32 = arith.constant 0 : i32
    %c0_i32_0 = arith.constant 0 : i32
    %c0_i32_1 = arith.constant 0 : i32
    return %c0_i32, %c0_i32_0 : i32, i32
  }
  func.func @transform_2(%arg0: i32) -> (i32, i32) {
    %c0_i32 = arith.constant 0 : i32
    %c0_i32_0 = arith.constant 0 : i32
    %c0_i32_1 = arith.constant 0 : i32
    return %c0_i32, %c0_i32_0 : i32, i32
  }
  func.func @transform_3(%arg0: i32) -> (i32, i32) {
    %c0_i32 = arith.constant 0 : i32
    %c0_i32_0 = arith.constant 0 : i32
    %c0_i32_1 = arith.constant 0 : i32
    return %c0_i32, %c0_i32_0 : i32, i32
  }
  func.func @transform_4(%arg0: i32) -> (i32, i32) {
    %c0_i32 = arith.constant 0 : i32
    %c0_i32_0 = arith.constant 0 : i32
    %c0_i32_1 = arith.constant 0 : i32
    return %c0_i32, %c0_i32_0 : i32, i32
  }
  func.func @transform_5(%arg0: i32) -> (i32, i32) {
    %c0_i32 = arith.constant 0 : i32
    %c0_i32_0 = arith.constant 0 : i32
    %c0_i32_1 = arith.constant 0 : i32
    return %c0_i32, %c0_i32_0 : i32, i32
  }
  func.func @transform_6(%arg0: i32) -> (i32, i32) {
    %c0_i32 = arith.constant 0 : i32
    %c0_i32_0 = arith.constant 0 : i32
    %c0_i32_1 = arith.constant 0 : i32
    return %c0_i32, %c0_i32_0 : i32, i32
  }
  func.func @transform_7(%arg0: i32) -> (i32, i32) {
    %c0_i32 = arith.constant 0 : i32
    %c0_i32_0 = arith.constant 0 : i32
    %c0_i32_1 = arith.constant 0 : i32
    return %c0_i32, %c0_i32_0 : i32, i32
  }
  func.func @transform_8(%arg0: i32) -> (i32, i32) {
    %c0_i32 = arith.constant 0 : i32
    %c0_i32_0 = arith.constant 0 : i32
    %c0_i32_1 = arith.constant 0 : i32
    return %c0_i32, %c0_i32_0 : i32, i32
  }
  func.func @transform_9(%arg0: i32) -> (i32, i32) {
    %c0_i32 = arith.constant 0 : i32
    %c0_i32_0 = arith.constant 0 : i32
    %c0_i32_1 = arith.constant 0 : i32
    return %c0_i32, %c0_i32_0 : i32, i32
  }
  func.func @transform_10(%arg0: i32) -> (i32, i32) {
    %c0_i32 = arith.constant 0 : i32
    %c0_i32_0 = arith.constant 0 : i32
    %c0_i32_1 = arith.constant 0 : i32
    return %c0_i32, %c0_i32_0 : i32, i32
  }
  func.func @transform_11(%arg0: i32) -> (i32, i32) {
    %c0_i32 = arith.constant 0 : i32
    %c0_i32_0 = arith.constant 0 : i32
    %c0_i32_1 = arith.constant 0 : i32
    return %c0_i32, %c0_i32_0 : i32, i32
  }
  func.func @transform_12(%arg0: i32) -> (i32, i32) {
    %c0_i32 = arith.constant 0 : i32
    %c0_i32_0 = arith.constant 0 : i32
    %c0_i32_1 = arith.constant 0 : i32
    return %c0_i32, %c0_i32_0 : i32, i32
  }
  func.func @transform_13(%arg0: i32) -> (i32, i32, i32) {
    %c0_i32 = arith.constant 0 : i32
    %c0_i32_0 = arith.constant 0 : i32
    %c0_i32_1 = arith.constant 0 : i32
    return %arg0, %c0_i32, %c0_i32_0 : i32, i32, i32
  }
  func.func @transform_14(%arg0: i32) -> (i32, i32, i32) {
    %c0_i32 = arith.constant 0 : i32
    %c0_i32_0 = arith.constant 0 : i32
    %c0_i32_1 = arith.constant 0 : i32
    return %arg0, %c0_i32, %c0_i32_0 : i32, i32, i32
  }
  func.func @transform_15(%arg0: i32) -> (i32, i32, i32) {
    %c0_i32 = arith.constant 0 : i32
    %c0_i32_0 = arith.constant 0 : i32
    %c0_i32_1 = arith.constant 0 : i32
    return %arg0, %c0_i32, %c0_i32_0 : i32, i32, i32
  }
  func.func @transform_16(%arg0: i32) -> (i32, i32, i32) {
    %c0_i32 = arith.constant 0 : i32
    %c0_i32_0 = arith.constant 0 : i32
    %c0_i32_1 = arith.constant 0 : i32
    return %arg0, %c0_i32, %c0_i32_0 : i32, i32, i32
  }
}

</mosaic_0001>

<llo_original>
// kernel: tpu_custom_call.1
$region0: #{tpu_custom_call.1}
  #allocation0 [shape = 'u32[]', space=smem, size = 0x4, offset = 0x4, fixed_abs, tag = 'smem constant byte address 0x4 - core index']
  #allocation1 [shape = 'u32[72,128]{1,0:T(1,128)}', space=vmem, size = 0x9000, scoped, tag = 'internal scratch']
  %s0 = inlined_call_operand.vmem [shape: f32[2,8,32], index: 0, kind: input, shape index: {}]
  %s1 = inlined_call_operand.vmem [shape: f32[1,32], index: 1, kind: input, shape index: {}]
  %s2 = inlined_call_operand.vmem [shape: f32[1,32], index: 2, kind: input, shape index: {}]
  %s3 = inlined_call_operand.vmem [shape: bf16[32,96], index: 3, kind: input, shape index: {}]
  %s4 = inlined_call_operand.vmem [shape: f32[1,96], index: 4, kind: input, shape index: {}]
  %s5 = inlined_call_operand.vmem [shape: bf16[32,32], index: 5, kind: input, shape index: {}]
  %s6 = inlined_call_operand.vmem [shape: f32[1,32], index: 6, kind: input, shape index: {}]
  %s7 = inlined_call_operand.vmem [shape: f32[1,32], index: 7, kind: input, shape index: {}]
  %s8 = inlined_call_operand.vmem [shape: f32[1,32], index: 8, kind: input, shape index: {}]
  %s9 = inlined_call_operand.vmem [shape: bf16[32,128], index: 9, kind: input, shape index: {}]
  %s10 = inlined_call_operand.vmem [shape: f32[1,128], index: 10, kind: input, shape index: {}]
  %s11 = inlined_call_operand.vmem [shape: bf16[128,32], index: 11, kind: input, shape index: {}]
  %s12 = inlined_call_operand.vmem [shape: f32[1,32], index: 12, kind: input, shape index: {}]
  %s13 = inlined_call_operand.hbm [shape: f32[2,8,32], index: 13, kind: output, shape index: {0}]
  %s14 = inlined_call_operand.hbm [shape: f32[2,8,32], index: 14, kind: output, shape index: {1}]
  %s15 = inlined_call_operand.hbm [shape: f32[2,8,32], index: 15, kind: output, shape index: {2}]
  %s16 = inlined_call_operand.hbm [shape: f32[2,8,32], index: 16, kind: output, shape index: {3}]
  %17 = xla_tuple %s13, %s14, %s15, %s16
  %s18 = sld [smem:[#allocation0]]
  $region109: #{tpu_custom_call.1} parent=0
    _
  %s20 = ssub.s32 1, %s18
  %s21 = scalar_select 0, %s20, %s18
  $region1: #{tpu_custom_call.1} parent=0
    #allocation2 [shape = 'u8[8192]{0}', space=vmem, size = 0x2000, scoped, tag = 'output window, operand 0']
    #allocation3 [shape = 's32[2]{0}', space=sflag, size = 0x8, scoped, tag = 'scoped memory for tpu_custom_call.1']
    #allocation4 [shape = 'u8[8192]{0}', space=vmem, size = 0x2000, scoped, tag = 'output window, operand 1']
    #allocation5 [shape = 's32[2]{0}', space=sflag, size = 0x8, scoped, tag = 'scoped memory for tpu_custom_call.1']
    #allocation6 [shape = 'u8[8192]{0}', space=vmem, size = 0x2000, scoped, tag = 'output window, operand 2']
    #allocation7 [shape = 'u8[8192]{0}', space=vmem, size = 0x2000, scoped, tag = 'output window, operand 3']
    #allocation8 [shape = 's32[2]{0}', space=sflag, size = 0x8, scoped, tag = 'scoped memory for tpu_custom_call.1']
    %22 = vsyncpa [#allocation3], 0
    %s23 = scalar_lea.sflag [#allocation3], 1
    %24 = vsyncpa %s23, 0
    %25 = vsyncpa [#allocation5], 0
    %s26 = scalar_lea.sflag [#allocation5], 1
    %27 = vsyncpa %s26, 0
    %28 = vsyncpa [#allocation8], 0
    %s29 = scalar_lea.sflag [#allocation8], 1
    %30 = vsyncpa %s29, 0
    loop: start=0, step=1, limit=4
    $region2: #{tpu_custom_call.1} parent=1 // loop_pre_header
      _
    $region3: #{tpu_custom_call.1} parent=1 // loop_header
      %s32 = sphi 0, %s36
      %p33 = scmp.ge.s32.totalorder %s32, 4
      %s42 = sphi 0, %s44
      %s45 = sphi 0, %s42
      %s46 = sphi 0, %s45
      %s62 = sphi 0, %s46
      %s66 = sphi 0, %s66
      %s68 = sphi 0, %s66
      %s69 = sphi 0, %s68
      %s83 = sphi 0, %s69
      %s87 = sphi 0, %s87
      %s89 = sphi 0, %s87
      %s90 = sphi 0, %s89
      %s104 = sphi 0, %s90
      %s108 = sphi 0, %s108
      %s110 = sphi 0, %s108
      %s111 = sphi 0, %s110
      %s125 = sphi 0, %s111
      %s129 = sphi 0, %s129
      %s131 = sphi 0, %s129
      %s132 = sphi 0, %s131
      %s146 = sphi 0, %s132
      %s150 = sphi 0, %s150
      %s152 = sphi 0, %s150
      %s153 = sphi 0, %s152
      %s167 = sphi 0, %s153
      %s171 = sphi 0, %s171
      %s173 = sphi 0, %s171
      %s174 = sphi 0, %s173
      %s188 = sphi 0, %s174
      %s192 = sphi 0, %s192
      %s194 = sphi 0, %s192
      %s195 = sphi 0, %s194
      %s209 = sphi 0, %s195
      %s213 = sphi 0, %s213
      %s215 = sphi 0, %s213
      %s216 = sphi 0, %s215
      %s230 = sphi 0, %s216
      %s234 = sphi 0, %s234
      %s236 = sphi 0, %s234
      %s237 = sphi 0, %s236
      %s251 = sphi 0, %s237
      %s255 = sphi 0, %s255
      %s257 = sphi 0, %s255
      %s258 = sphi 0, %s257
      %s272 = sphi 0, %s258
      %s276 = sphi 0, %s276
      %s278 = sphi 0, %s276
      %s279 = sphi 0, %s278
      %s293 = sphi 0, %s279
      %s297 = sphi 0, %s297
      %s299 = sphi 0, %s297
      %s300 = sphi 0, %s299
      %s314 = sphi 0, %s300
      %s320 = sphi 0, %s322
      %s323 = sphi 0, %s320
      %s324 = sphi 0, %s323
      %s340 = sphi 0, %s324
      %s346 = sphi 0, %s348
      %s349 = sphi 0, %s346
      %s350 = sphi 0, %s349
      %s366 = sphi 0, %s350
      %s372 = sphi 0, %s374
      %s375 = sphi 0, %s372
      %s376 = sphi 0, %s375
      %s392 = sphi 0, %s376
      %s398 = sphi 0, %s400
      %s401 = sphi 0, %s398
      %s402 = sphi 0, %s401
      %s418 = sphi 0, %s402
    $region4: #{tpu_custom_call.1} parent=1 // loop_header_branch
      %35 = sbr.rel (%p33) target = $region8
    $region5: #{tpu_custom_call.1} parent=1 // loop_body
      %s37 = ssub.s32 %s32, 1
      %s38 = ssub.s32 %s32, 2
      %s39 = sadd.s32 %s32, 1
      %s40 = ssub.s32 %s32, %s39
      %p41 = scmp.eq.s32.totalorder %s40, 0
      %s43 = sadd.s32 %s42, 1
      %s44 = scalar_select %p41, %s42, %s43
      %p47 = pneg %p41
      %p48 = scmp.eq.s32.totalorder %s32, 1
      %p49 = por %p47, %p48
      %p50 = scmp.ne.s32.totalorder %s42, %s45
      %p51 = scmp.eq.s32.totalorder %s32, 0
      %p52 = por %p50, %p51
      %p53 = scmp.ne.s32.totalorder %s42, %s45
      %p54 = scmp.eq.s32.totalorder %s37, 1
      %p55 = por %p53, %p54
      %p56 = scmp.ne.s32.totalorder %s45, %s46
      %p57 = scmp.eq.s32.totalorder %s37, 0
      %p58 = por %p56, %p57
      %p59 = scmp.ne.s32.totalorder %s45, %s46
      %p60 = scmp.eq.s32.totalorder %s38, 1
      %p61 = por %p59, %p60
      %p63 = scmp.ne.s32.totalorder %s46, %s62
      %p64 = scmp.eq.s32.totalorder %s38, 0
      %p65 = por %p63, %p64
      %s67 = sadd.s32 %s66, 1
      %p70 = scmp.eq.s32.totalorder %s32, 1
      %p71 = scmp.ne.s32.totalorder %s66, %s68
      %p72 = scmp.eq.s32.totalorder %s32, 0
      %p73 = por %p71, %p72
      %p74 = scmp.ne.s32.totalorder %s66, %s68
      %p75 = scmp.eq.s32.totalorder %s37, 1
      %p76 = por %p74, %p75
      %p77 = scmp.ne.s32.totalorder %s68, %s69
      %p78 = scmp.eq.s32.totalorder %s37, 0
      %p79 = por %p77, %p78
      %p80 = scmp.ne.s32.totalorder %s68, %s69
      %p81 = scmp.eq.s32.totalorder %s38, 1
      %p82 = por %p80, %p81
      %p84 = scmp.ne.s32.totalorder %s69, %s83
      %p85 = scmp.eq.s32.totalorder %s38, 0
      %p86 = por %p84, %p85
      %s88 = sadd.s32 %s87, 1
      %p91 = scmp.eq.s32.totalorder %s32, 1
      %p92 = scmp.ne.s32.totalorder %s87, %s89
      %p93 = scmp.eq.s32.totalorder %s32, 0
      %p94 = por %p92, %p93
      %p95 = scmp.ne.s32.totalorder %s87, %s89
      %p96 = scmp.eq.s32.totalorder %s37, 1
      %p97 = por %p95, %p96
      %p98 = scmp.ne.s32.totalorder %s89, %s90
      %p99 = scmp.eq.s32.totalorder %s37, 0
      %p100 = por %p98, %p99
      %p101 = scmp.ne.s32.totalorder %s89, %s90
      %p102 = scmp.eq.s32.totalorder %s38, 1
      %p103 = por %p101, %p102
      %p105 = scmp.ne.s32.totalorder %s90, %s104
      %p106 = scmp.eq.s32.totalorder %s38, 0
      %p107 = por %p105, %p106
      %s109 = sadd.s32 %s108, 1
      %p112 = scmp.eq.s32.totalorder %s32, 1
      %p113 = scmp.ne.s32.totalorder %s108, %s110
      %p114 = scmp.eq.s32.totalorder %s32, 0
      %p115 = por %p113, %p114
      %p116 = scmp.ne.s32.totalorder %s108, %s110
      %p117 = scmp.eq.s32.totalorder %s37, 1
      %p118 = por %p116, %p117
      %p119 = scmp.ne.s32.totalorder %s110, %s111
      %p120 = scmp.eq.s32.totalorder %s37, 0
      %p121 = por %p119, %p120
      %p122 = scmp.ne.s32.totalorder %s110, %s111
      %p123 = scmp.eq.s32.totalorder %s38, 1
      %p124 = por %p122, %p123
      %p126 = scmp.ne.s32.totalorder %s111, %s125
      %p127 = scmp.eq.s32.totalorder %s38, 0
      %p128 = por %p126, %p127
      %s130 = sadd.s32 %s129, 1
      %p133 = scmp.eq.s32.totalorder %s32, 1
      %p134 = scmp.ne.s32.totalorder %s129, %s131
      %p135 = scmp.eq.s32.totalorder %s32, 0
      %p136 = por %p134, %p135
      %p137 = scmp.ne.s32.totalorder %s129, %s131
      %p138 = scmp.eq.s32.totalorder %s37, 1
      %p139 = por %p137, %p138
      %p140 = scmp.ne.s32.totalorder %s131, %s132
      %p141 = scmp.eq.s32.totalorder %s37, 0
      %p142 = por %p140, %p141
      %p143 = scmp.ne.s32.totalorder %s131, %s132
      %p144 = scmp.eq.s32.totalorder %s38, 1
      %p145 = por %p143, %p144
      %p147 = scmp.ne.s32.totalorder %s132, %s146
      %p148 = scmp.eq.s32.totalorder %s38, 0
      %p149 = por %p147, %p148
      %s151 = sadd.s32 %s150, 1
      %p154 = scmp.eq.s32.totalorder %s32, 1
      %p155 = scmp.ne.s32.totalorder %s150, %s152
      %p156 = scmp.eq.s32.totalorder %s32, 0
      %p157 = por %p155, %p156
      %p158 = scmp.ne.s32.totalorder %s150, %s152
      %p159 = scmp.eq.s32.totalorder %s37, 1
      %p160 = por %p158, %p159
      %p161 = scmp.ne.s32.totalorder %s152, %s153
      %p162 = scmp.eq.s32.totalorder %s37, 0
      %p163 = por %p161, %p162
      %p164 = scmp.ne.s32.totalorder %s152, %s153
      %p165 = scmp.eq.s32.totalorder %s38, 1
      %p166 = por %p164, %p165
      %p168 = scmp.ne.s32.totalorder %s153, %s167
      %p169 = scmp.eq.s32.totalorder %s38, 0
      %p170 = por %p168, %p169
      %s172 = sadd.s32 %s171, 1
      %p175 = scmp.eq.s32.totalorder %s32, 1
      %p176 = scmp.ne.s32.totalorder %s171, %s173
      %p177 = scmp.eq.s32.totalorder %s32, 0
      %p178 = por %p176, %p177
      %p179 = scmp.ne.s32.totalorder %s171, %s173
      %p180 = scmp.eq.s32.totalorder %s37, 1
      %p181 = por %p179, %p180
      %p182 = scmp.ne.s32.totalorder %s173, %s174
      %p183 = scmp.eq.s32.totalorder %s37, 0
      %p184 = por %p182, %p183
      %p185 = scmp.ne.s32.totalorder %s173, %s174
      %p186 = scmp.eq.s32.totalorder %s38, 1
      %p187 = por %p185, %p186
      %p189 = scmp.ne.s32.totalorder %s174, %s188
      %p190 = scmp.eq.s32.totalorder %s38, 0
      %p191 = por %p189, %p190
      %s193 = sadd.s32 %s192, 1
      %p196 = scmp.eq.s32.totalorder %s32, 1
      %p197 = scmp.ne.s32.totalorder %s192, %s194
      %p198 = scmp.eq.s32.totalorder %s32, 0
      %p199 = por %p197, %p198
      %p200 = scmp.ne.s32.totalorder %s192, %s194
      %p201 = scmp.eq.s32.totalorder %s37, 1
      %p202 = por %p200, %p201
      %p203 = scmp.ne.s32.totalorder %s194, %s195
      %p204 = scmp.eq.s32.totalorder %s37, 0
      %p205 = por %p203, %p204
      %p206 = scmp.ne.s32.totalorder %s194, %s195
      %p207 = scmp.eq.s32.totalorder %s38, 1
      %p208 = por %p206, %p207
      %p210 = scmp.ne.s32.totalorder %s195, %s209
      %p211 = scmp.eq.s32.totalorder %s38, 0
      %p212 = por %p210, %p211
      %s214 = sadd.s32 %s213, 1
      %p217 = scmp.eq.s32.totalorder %s32, 1
      %p218 = scmp.ne.s32.totalorder %s213, %s215
      %p219 = scmp.eq.s32.totalorder %s32, 0
      %p220 = por %p218, %p219
      %p221 = scmp.ne.s32.totalorder %s213, %s215
      %p222 = scmp.eq.s32.totalorder %s37, 1
      %p223 = por %p221, %p222
      %p224 = scmp.ne.s32.totalorder %s215, %s216
      %p225 = scmp.eq.s32.totalorder %s37, 0
      %p226 = por %p224, %p225
      %p227 = scmp.ne.s32.totalorder %s215, %s216
      %p228 = scmp.eq.s32.totalorder %s38, 1
      %p229 = por %p227, %p228
      %p231 = scmp.ne.s32.totalorder %s216, %s230
      %p232 = scmp.eq.s32.totalorder %s38, 0
      %p233 = por %p231, %p232
      %s235 = sadd.s32 %s234, 1
      %p238 = scmp.eq.s32.totalorder %s32, 1
      %p239 = scmp.ne.s32.totalorder %s234, %s236
      %p240 = scmp.eq.s32.totalorder %s32, 0
      %p241 = por %p239, %p240
      %p242 = scmp.ne.s32.totalorder %s234, %s236
      %p243 = scmp.eq.s32.totalorder %s37, 1
      %p244 = por %p242, %p243
      %p245 = scmp.ne.s32.totalorder %s236, %s237
      %p246 = scmp.eq.s32.totalorder %s37, 0
      %p247 = por %p245, %p246
      %p248 = scmp.ne.s32.totalorder %s236, %s237
      %p249 = scmp.eq.s32.totalorder %s38, 1
      %p250 = por %p248, %p249
      %p252 = scmp.ne.s32.totalorder %s237, %s251
      %p253 = scmp.eq.s32.totalorder %s38, 0
      %p254 = por %p252, %p253
      %s256 = sadd.s32 %s255, 1
      %p259 = scmp.eq.s32.totalorder %s32, 1
      %p260 = scmp.ne.s32.totalorder %s255, %s257
      %p261 = scmp.eq.s32.totalorder %s32, 0
      %p262 = por %p260, %p261
      %p263 = scmp.ne.s32.totalorder %s255, %s257
      %p264 = scmp.eq.s32.totalorder %s37, 1
      %p265 = por %p263, %p264
      %p266 = scmp.ne.s32.totalorder %s257, %s258
      %p267 = scmp.eq.s32.totalorder %s37, 0
      %p268 = por %p266, %p267
      %p269 = scmp.ne.s32.totalorder %s257, %s258
      %p270 = scmp.eq.s32.totalorder %s38, 1
      %p271 = por %p269, %p270
      %p273 = scmp.ne.s32.totalorder %s258, %s272
      %p274 = scmp.eq.s32.totalorder %s38, 0
      %p275 = por %p273, %p274
      %s277 = sadd.s32 %s276, 1
      %p280 = scmp.eq.s32.totalorder %s32, 1
      %p281 = scmp.ne.s32.totalorder %s276, %s278
      %p282 = scmp.eq.s32.totalorder %s32, 0
      %p283 = por %p281, %p282
      %p284 = scmp.ne.s32.totalorder %s276, %s278
      %p285 = scmp.eq.s32.totalorder %s37, 1
      %p286 = por %p284, %p285
      %p287 = scmp.ne.s32.totalorder %s278, %s279
      %p288 = scmp.eq.s32.totalorder %s37, 0
      %p289 = por %p287, %p288
      %p290 = scmp.ne.s32.totalorder %s278, %s279
      %p291 = scmp.eq.s32.totalorder %s38, 1
      %p292 = por %p290, %p291
      %p294 = scmp.ne.s32.totalorder %s279, %s293
      %p295 = scmp.eq.s32.totalorder %s38, 0
      %p296 = por %p294, %p295
      %s298 = sadd.s32 %s297, 1
      %p301 = scmp.eq.s32.totalorder %s32, 1
      %p302 = scmp.ne.s32.totalorder %s297, %s299
      %p303 = scmp.eq.s32.totalorder %s32, 0
      %p304 = por %p302, %p303
      %p305 = scmp.ne.s32.totalorder %s297, %s299
      %p306 = scmp.eq.s32.totalorder %s37, 1
      %p307 = por %p305, %p306
      %p308 = scmp.ne.s32.totalorder %s299, %s300
      %p309 = scmp.eq.s32.totalorder %s37, 0
      %p310 = por %p308, %p309
      %p311 = scmp.ne.s32.totalorder %s299, %s300
      %p312 = scmp.eq.s32.totalorder %s38, 1
      %p313 = por %p311, %p312
      %p315 = scmp.ne.s32.totalorder %s300, %s314
      %p316 = scmp.eq.s32.totalorder %s38, 0
      %p317 = por %p315, %p316
      %s318 = ssub.s32 %s32, %s39
      %p319 = scmp.eq.s32.totalorder %s318, 0
      %s321 = sadd.s32 %s320, 1
      %s322 = scalar_select %p319, %s320, %s321
      %p325 = pneg %p319
      %p326 = scmp.eq.s32.totalorder %s32, 1
      %p327 = por %p325, %p326
      %p328 = scmp.ne.s32.totalorder %s320, %s323
      %p329 = scmp.eq.s32.totalorder %s32, 0
      %p330 = por %p328, %p329
      %p331 = scmp.ne.s32.totalorder %s320, %s323
      %p332 = scmp.eq.s32.totalorder %s37, 1
      %p333 = por %p331, %p332
      %p334 = scmp.ne.s32.totalorder %s323, %s324
      %p335 = scmp.eq.s32.totalorder %s37, 0
      %p336 = por %p334, %p335
      %p337 = scmp.ne.s32.totalorder %s323, %s324
      %p338 = scmp.eq.s32.totalorder %s38, 1
      %p339 = por %p337, %p338
      %p341 = scmp.ne.s32.totalorder %s324, %s340
      %p342 = scmp.eq.s32.totalorder %s38, 0
      %p343 = por %p341, %p342
      %s344 = ssub.s32 %s32, %s39
      %p345 = scmp.eq.s32.totalorder %s344, 0
      %s347 = sadd.s32 %s346, 1
      %s348 = scalar_select %p345, %s346, %s347
      %p351 = pneg %p345
      %p352 = scmp.eq.s32.totalorder %s32, 1
      %p353 = por %p351, %p352
      %p354 = scmp.ne.s32.totalorder %s346, %s349
      %p355 = scmp.eq.s32.totalorder %s32, 0
      %p356 = por %p354, %p355
      %p357 = scmp.ne.s32.totalorder %s346, %s349
      %p358 = scmp.eq.s32.totalorder %s37, 1
      %p359 = por %p357, %p358
      %p360 = scmp.ne.s32.totalorder %s349, %s350
      %p361 = scmp.eq.s32.totalorder %s37, 0
      %p362 = por %p360, %p361
      %p363 = scmp.ne.s32.totalorder %s349, %s350
      %p364 = scmp.eq.s32.totalorder %s38, 1
      %p365 = por %p363, %p364
      %p367 = scmp.ne.s32.totalorder %s350, %s366
      %p368 = scmp.eq.s32.totalorder %s38, 0
      %p369 = por %p367, %p368
      %s370 = ssub.s32 %s32, %s39
      %p371 = scmp.eq.s32.totalorder %s370, 0
      %s373 = sadd.s32 %s372, 1
      %s374 = scalar_select %p371, %s372, %s373
      %p377 = pneg %p371
      %p378 = scmp.eq.s32.totalorder %s32, 1
      %p379 = por %p377, %p378
      %p380 = scmp.ne.s32.totalorder %s372, %s375
      %p381 = scmp.eq.s32.totalorder %s32, 0
      %p382 = por %p380, %p381
      %p383 = scmp.ne.s32.totalorder %s372, %s375
      %p384 = scmp.eq.s32.totalorder %s37, 1
      %p385 = por %p383, %p384
      %p386 = scmp.ne.s32.totalorder %s375, %s376
      %p387 = scmp.eq.s32.totalorder %s37, 0
      %p388 = por %p386, %p387
      %p389 = scmp.ne.s32.totalorder %s375, %s376
      %p390 = scmp.eq.s32.totalorder %s38, 1
      %p391 = por %p389, %p390
      %p393 = scmp.ne.s32.totalorder %s376, %s392
      %p394 = scmp.eq.s32.totalorder %s38, 0
      %p395 = por %p393, %p394
      %s396 = ssub.s32 %s32, %s39
      %p397 = scmp.eq.s32.totalorder %s396, 0
      %s399 = sadd.s32 %s398, 1
      %s400 = scalar_select %p397, %s398, %s399
      %p403 = pneg %p397
      %p404 = scmp.eq.s32.totalorder %s32, 1
      %p405 = por %p403, %p404
      %p406 = scmp.ne.s32.totalorder %s398, %s401
      %p407 = scmp.eq.s32.totalorder %s32, 0
      %p408 = por %p406, %p407
      %p409 = scmp.ne.s32.totalorder %s398, %s401
      %p410 = scmp.eq.s32.totalorder %s37, 1
      %p411 = por %p409, %p410
      %p412 = scmp.ne.s32.totalorder %s401, %s402
      %p413 = scmp.eq.s32.totalorder %s37, 0
      %p414 = por %p412, %p413
      %p415 = scmp.ne.s32.totalorder %s401, %s402
      %p416 = scmp.eq.s32.totalorder %s38, 1
      %p417 = por %p415, %p416
      %p419 = scmp.ne.s32.totalorder %s402, %s418
      %p420 = scmp.eq.s32.totalorder %s38, 0
      %p421 = por %p419, %p420
      %p422 = scmp.le.s32.totalorder 1, %s32
      %p423 = scmp.lt.s32.totalorder %s32, 3
      %p424 = pnand %p422, %p423
      %p425 = pneg %p424
      // Predicated region
      $region9: #{tpu_custom_call.1} parent=5 // pred_check
        _
      $region10: #{tpu_custom_call.1} parent=5 // pred_check_branch
        %427 = sbr.rel (%p424) target = $region12
      $region11: #{tpu_custom_call.1} parent=5 // pred_region
        %s428 = ssub.s32 %s32, 1
        // Predicated region
        $region13: #{tpu_custom_call.1} parent=11 // pred_check
          %p429 = pneg %p79
        $region14: #{tpu_custom_call.1} parent=11 // pred_check_branch
          %431 = sbr.rel (%p429) target = $region16
        $region15: #{tpu_custom_call.1} parent=11 // pred_region
          _
        $region16: #{tpu_custom_call.1} parent=11 // pred_fallthru
          _
        // Predicated region
        $region17: #{tpu_custom_call.1} parent=11 // pred_check
          %p432 = pneg %p100
        $region18: #{tpu_custom_call.1} parent=11 // pred_check_branch
          %434 = sbr.rel (%p432) target = $region20
        $region19: #{tpu_custom_call.1} parent=11 // pred_region
          _
        $region20: #{tpu_custom_call.1} parent=11 // pred_fallthru
          _
        // Predicated region
        $region21: #{tpu_custom_call.1} parent=11 // pred_check
          %p435 = pneg %p121
        $region22: #{tpu_custom_call.1} parent=11 // pred_check_branch
          %437 = sbr.rel (%p435) target = $region24
        $region23: #{tpu_custom_call.1} parent=11 // pred_region
          _
        $region24: #{tpu_custom_call.1} parent=11 // pred_fallthru
          _
        // Predicated region
        $region25: #{tpu_custom_call.1} parent=11 // pred_check
          %p438 = pneg %p142
        $region26: #{tpu_custom_call.1} parent=11 // pred_check_branch
          %440 = sbr.rel (%p438) target = $region28
        $region27: #{tpu_custom_call.1} parent=11 // pred_region
          _
        $region28: #{tpu_custom_call.1} parent=11 // pred_fallthru
          _
        // Predicated region
        $region29: #{tpu_custom_call.1} parent=11 // pred_check
          %p441 = pneg %p163
        $region30: #{tpu_custom_call.1} parent=11 // pred_check_branch
          %443 = sbr.rel (%p441) target = $region32
        $region31: #{tpu_custom_call.1} parent=11 // pred_region
          _
        $region32: #{tpu_custom_call.1} parent=11 // pred_fallthru
          _
        // Predicated region
        $region33: #{tpu_custom_call.1} parent=11 // pred_check
          %p444 = pneg %p184
        $region34: #{tpu_custom_call.1} parent=11 // pred_check_branch
          %446 = sbr.rel (%p444) target = $region36
        $region35: #{tpu_custom_call.1} parent=11 // pred_region
          _
        $region36: #{tpu_custom_call.1} parent=11 // pred_fallthru
          _
        // Predicated region
        $region37: #{tpu_custom_call.1} parent=11 // pred_check
          %p447 = pneg %p205
        $region38: #{tpu_custom_call.1} parent=11 // pred_check_branch
          %449 = sbr.rel (%p447) target = $region40
        $region39: #{tpu_custom_call.1} parent=11 // pred_region
          _
        $region40: #{tpu_custom_call.1} parent=11 // pred_fallthru
          _
        // Predicated region
        $region41: #{tpu_custom_call.1} parent=11 // pred_check
          %p450 = pneg %p226
        $region42: #{tpu_custom_call.1} parent=11 // pred_check_branch
          %452 = sbr.rel (%p450) target = $region44
        $region43: #{tpu_custom_call.1} parent=11 // pred_region
          _
        $region44: #{tpu_custom_call.1} parent=11 // pred_fallthru
          _
        // Predicated region
        $region45: #{tpu_custom_call.1} parent=11 // pred_check
          %p453 = pneg %p247
        $region46: #{tpu_custom_call.1} parent=11 // pred_check_branch
          %455 = sbr.rel (%p453) target = $region48
        $region47: #{tpu_custom_call.1} parent=11 // pred_region
          _
        $region48: #{tpu_custom_call.1} parent=11 // pred_fallthru
          _
        // Predicated region
        $region49: #{tpu_custom_call.1} parent=11 // pred_check
          %p456 = pneg %p268
        $region50: #{tpu_custom_call.1} parent=11 // pred_check_branch
          %458 = sbr.rel (%p456) target = $region52
        $region51: #{tpu_custom_call.1} parent=11 // pred_region
          _
        $region52: #{tpu_custom_call.1} parent=11 // pred_fallthru
          _
        // Predicated region
        $region53: #{tpu_custom_call.1} parent=11 // pred_check
          %p459 = pneg %p289
        $region54: #{tpu_custom_call.1} parent=11 // pred_check_branch
          %461 = sbr.rel (%p459) target = $region56
        $region55: #{tpu_custom_call.1} parent=11 // pred_region
          _
        $region56: #{tpu_custom_call.1} parent=11 // pred_fallthru
          _
        // Predicated region
        $region57: #{tpu_custom_call.1} parent=11 // pred_check
          %p462 = pneg %p310
        $region58: #{tpu_custom_call.1} parent=11 // pred_check_branch
          %464 = sbr.rel (%p462) target = $region60
        $region59: #{tpu_custom_call.1} parent=11 // pred_region
          _
        $region60: #{tpu_custom_call.1} parent=11 // pred_fallthru
          _
      $region12: #{tpu_custom_call.1} parent=5 // pred_fallthru
        _
      %p465 = scmp.lt.s32.totalorder %s32, 2
      // Predicated region
      $region61: #{tpu_custom_call.1} parent=5 // pred_check
        %p466 = pneg %p465
      $region62: #{tpu_custom_call.1} parent=5 // pred_check_branch
        %468 = sbr.rel (%p466) target = $region64
      $region63: #{tpu_custom_call.1} parent=5 // pred_region
        // Predicated region
        $region65: #{tpu_custom_call.1} parent=63 // pred_check
          %p469 = pneg %p52
        $region66: #{tpu_custom_call.1} parent=63 // pred_check_branch
          %471 = sbr.rel (%p469) target = $region68
        $region67: #{tpu_custom_call.1} parent=63 // pred_region
          %p472 = scmp.lt.s32.totalorder %s32, 1
          %s473 = scalar_select %p472, %s32, 1
          %s474 = smul.addr %s473, 8
          %s475 = scalar_lea.vmem %s0, %s474
        $region68: #{tpu_custom_call.1} parent=63 // pred_fallthru
          _
      $region64: #{tpu_custom_call.1} parent=5 // pred_fallthru
        _
      %p476 = scmp.le.s32.totalorder 1, %s32
      %p477 = scmp.lt.s32.totalorder %s32, 3
      %p478 = pnand %p476, %p477
      %p479 = pneg %p478
      // Predicated region
      $region69: #{tpu_custom_call.1} parent=5 // pred_check
        _
      $region70: #{tpu_custom_call.1} parent=5 // pred_check_branch
        %481 = sbr.rel (%p478) target = $region72
      $region71: #{tpu_custom_call.1} parent=5 // pred_region
        %s482 = ssub.s32 %s32, 1
        %p483 = scmp.lt.s32.totalorder %s37, 1
        %s484 = scalar_select %p483, %s37, 1
        %s485 = smul.addr %s484, 8
        %s486 = scalar_lea.vmem %s0, %s485
        %p487 = pneg %p58
        %p488 = pneg %p55
        %p489 = pneg %p79
        %p490 = pneg %p76
        %p491 = pneg %p100
        %p492 = pneg %p97
        %p493 = pneg %p121
        %p494 = pneg %p118
        %p495 = pneg %p142
        %p496 = pneg %p139
        %p497 = pneg %p163
        %p498 = pneg %p160
        %p499 = pneg %p184
        %p500 = pneg %p181
        %p501 = pneg %p205
        %p502 = pneg %p202
        %p503 = pneg %p226
        %p504 = pneg %p223
        %p505 = pneg %p247
        %p506 = pneg %p244
        %p507 = pneg %p268
        %p508 = pneg %p265
        %p509 = pneg %p289
        %p510 = pneg %p286
        %p511 = pneg %p310
        %p512 = pneg %p307
        %p513 = pneg %p336
        %p514 = pneg %p333
        %s515 = sand.u32 %s323, 1
        %s516 = scalar_lea.sflag [#allocation3], %s515
        %s517 = sand.u32 %s323, 1
        %s518 = smul.addr %s517, 8
        %s519 = scalar_lea.vmem [#allocation2], %s518
        %p520 = pneg %p362
        %p521 = pneg %p359
        %s522 = sand.u32 %s37, 1
        %s523 = scalar_lea.sflag [#allocation5], %s522
        %s524 = sand.u32 %s349, 1
        %s525 = smul.addr %s524, 8
        %s526 = scalar_lea.vmem [#allocation4], %s525
        %p527 = pneg %p388
        %p528 = pneg %p385
        %s529 = sand.u32 %s37, 1
        %s530 = scalar_lea.sflag [#allocation5], %s529
        %s531 = sand.u32 %s375, 1
        %s532 = smul.addr %s531, 8
        %s533 = scalar_lea.vmem [#allocation6], %s532
        %p534 = pneg %p414
        %p535 = pneg %p411
        %s536 = sand.u32 %s401, 1
        %s537 = scalar_lea.sflag [#allocation8], %s536
        %s538 = sand.u32 %s401, 1
        %s539 = smul.addr %s538, 8
        %s540 = scalar_lea.vmem [#allocation7], %s539
        %p541 = scmp.lt.s32.totalorder %s37, 1
        %s542 = scalar_select %p541, %s37, 1
        %s543 = smul.addr %s542, 8
        %s544 = scalar_lea.vmem %s0, %s543
        %v546 = vld [vmem:[%s544] sm:$0xff]
        %v547 = vld [vmem:[%s1] sm:$0x1]
        %v548 = vld [vmem:[%s2] sm:$0x1]
        %vm549 = vcmask 261120
        %v550 = vsel %vm549, %v546, 0.0
        %551 = vadd.xlane.f32.xlu0 %v550
        %v552 = vpop.xlane.xlu0 %551
        %v553 = vrcp.pop 32.0
        %v554 = vmul.f32 32.0, %v553
        %v555 = vsub.f32 1.0, %v554
        %v556 = vmul.f32 %v553, %v555
        %v557 = vadd.f32 %v553, %v556
        %vm558 = vweird.f32 %v553
        %v559 = vsel %vm558, %v553, %v557
        %v560 = vmul.f32 %v552, %v559
        %v561 = vsub.f32 %v546, %v560
        %v562 = vmul.f32 %v561, %v561
        %v563 = vsel %vm549, %v562, 0.0
        %564 = vadd.xlane.f32.xlu0 %v563
        %v565 = vpop.xlane.xlu0 %564
        %v566 = vmul.f32 %v565, %v559
        %v567 = vadd.f32 %v566, 1e-05
        %v568 = vrsqrt.pop %v567
        %v569 = vmul.f32 %v568, %v567
        %v570 = vmul.f32 %v569, %v568
        %v571 = vmul.f32 0.5, %v570
        %v572 = vsub.f32 1.5, %v571
        %v573 = vmul.f32 %v568, %v572
        %vm574 = vweird.f32 %v567
        %vm575 = vweird.f32 %v568
        %vm576 = vmor %vm574, %vm575
        %v577 = vsel %vm576, %v568, %v573
        %v578 = vmul.f32 %v561, %v577
        %v580 = vperm.slane %v547, 0
        %v582 = vmul.f32 %v578, %v580
        %v584 = vperm.slane %v548, 0
        %v586 = vadd.f32 %v582, %v584
        %v587 = vpack.c.bf16 %v586, %v586
        %v588 = vld [vmem:[%s3] sm:$0xf]
        %v589 = vld [vmem:[%s3 + $0x4] sm:$0xf]
        %v590 = vld [vmem:[%s3 + $0x8] sm:$0xf]
        %v591 = vld [vmem:[%s3 + $0xc] sm:$0xf]
        %v592 = vld [vmem:[%s4] sm:$0x1]
        %v594 = vperm.slane %v592, 0
        %v600 = vunpack.c.l.b16 %v588
        %v601 = vunpack.c.l.b16 %v589
        %v602 = vunpack.c.l.b16 %v590
        %v603 = vunpack.c.l.b16 %v591
        %v604 = vpack.c.b16 %v601, %v600
        %v605 = vpack.c.b16 %v603, %v602
        %v609 = vsel %vm549, %v587, 0
        %611 = vmatpush.bf16.msra.mxu0 0
        %612 = vmatpush.bf16.msra.mxu0 0
        %613 = vmatpush.bf16.msra.mxu0 0
        %614 = vmatpush.bf16.msra.mxu0 0
        %615 = vmatpush.bf16.msra.mxu0 0
        %616 = vmatpush.bf16.msra.mxu0 0
        %617 = vmatpush.bf16.msra.mxu0 %v605
        %618 = vmatpush.bf16.msra.mxu0 %v604
        %619 = vmatmul.bf16.gmra.mxu0 %v609
        %v620 = vpop.f32.mrf.mxu0
        %v621 = vadd.f32 %v594, %v620
        %v622 = vpop.f32.mrf.mxu0
        %623 = vdwg.mxu0
        %v624 = vld [vmem:[%s5] sm:$0xf]
        %v625 = vld [vmem:[%s5 + $0x4] sm:$0xf]
        %v626 = vld [vmem:[%s5 + $0x8] sm:$0xf]
        %v627 = vld [vmem:[%s5 + $0xc] sm:$0xf]
        %v628 = vld [vmem:[%s6] sm:$0x1]
        %v629 = vpack.c.bf16 %v621, %v621
        %v631 = vperm.slane %v628, 0
        %v637 = vunpack.c.l.b16 %v624
        %v638 = vunpack.c.l.b16 %v625
        %v639 = vunpack.c.l.b16 %v626
        %v640 = vunpack.c.l.b16 %v627
        %v641 = vpack.c.b16 %v638, %v637
        %v642 = vpack.c.b16 %v640, %v639
        %v646 = vsel %vm549, %v629, 0
        %648 = vmatpush.bf16.msra.mxu0 0
        %649 = vmatpush.bf16.msra.mxu0 0
        %650 = vmatpush.bf16.msra.mxu0 0
        %651 = vmatpush.bf16.msra.mxu0 0
        %652 = vmatpush.bf16.msra.mxu0 0
        %653 = vmatpush.bf16.msra.mxu0 0
        %654 = vmatpush.bf16.msra.mxu0 %v642
        %655 = vmatpush.bf16.msra.mxu0 %v641
        %656 = vmatmul.bf16.gmra.mxu0 %v646
        %v657 = vpop.f32.mrf.mxu0
        %v658 = vadd.f32 %v631, %v657
        %v659 = vpop.f32.mrf.mxu0
        %660 = vdwg.mxu0
        %661 = vst.msk [vmem:[%s526] sm:$0xff] %vm549, %v658
        %v663 = vunpack.c.l.b16 %v629
        %v664 = vpack.c.b16 %v663, %v663
        %665 = vrot.lane.b32.xlu0 %v664, 96
        %v666 = vpop.permute.xlu0 %665
        %v668 = vsel %vm549, %v666, 0
        %670 = vmatpush.bf16.msra.mxu0 0
        %671 = vmatpush.bf16.msra.mxu0 0
        %672 = vmatpush.bf16.msra.mxu0 0
        %673 = vmatpush.bf16.msra.mxu0 0
        %674 = vmatpush.bf16.msra.mxu0 0
        %675 = vmatpush.bf16.msra.mxu0 0
        %676 = vmatpush.bf16.msra.mxu0 %v642
        %677 = vmatpush.bf16.msra.mxu0 %v641
        %678 = vmatmul.bf16.gmra.mxu0 %v668
        %v679 = vpop.f32.mrf.mxu0
        %v680 = vadd.f32 %v631, %v679
        %v681 = vpop.f32.mrf.mxu0
        %682 = vdwg.mxu0
        %683 = vst.msk [vmem:[%s533] sm:$0xff] %vm549, %v680
        %684 = vrot.lane.b32.xlu0 %v664, 64
        %v685 = vpop.permute.xlu0 %684
        %v687 = vsel %vm549, %v685, 0
        %689 = vmatpush.bf16.msra.mxu0 0
        %690 = vmatpush.bf16.msra.mxu0 0
        %691 = vmatpush.bf16.msra.mxu0 0
        %692 = vmatpush.bf16.msra.mxu0 0
        %693 = vmatpush.bf16.msra.mxu0 0
        %694 = vmatpush.bf16.msra.mxu0 0
        %695 = vmatpush.bf16.msra.mxu0 %v642
        %696 = vmatpush.bf16.msra.mxu0 %v641
        %697 = vmatmul.bf16.gmra.mxu0 %v687
        %v698 = vpop.f32.mrf.mxu0
        %v699 = vadd.f32 %v631, %v698
        %v700 = vpop.f32.mrf.mxu0
        %701 = vdwg.mxu0
        %v702 = vmul.f32 %v621, 0.35355338
        %v703 = vpack.c.bf16 %v702, %v702
        %705 = vrot.lane.b32.xlu0 %v703, 120
        %v706 = vpop.permute.xlu0 %705
        %707 = vrot.lane.b32.xlu0 %v703, 112
        %v708 = vpop.permute.xlu0 %707
        %709 = vrot.lane.b32.xlu0 %v703, 104
        %v710 = vpop.permute.xlu0 %709
        %v713 = vpack.i.b16 %v706, %v703
        %v714 = vshrl.u32 %v703, 16
        %v715 = vshrl.u32 %v706, 16
        %v716 = vpack.i.b16 %v715, %v714
        %v719 = vpack.i.b16 %v710, %v708
        %v720 = vshrl.u32 %v708, 16
        %v721 = vshrl.u32 %v710, 16
        %v722 = vpack.i.b16 %v721, %v720
        %v725 = vunpack.c.l.s4 1983009808
        %v726 = vunpack.c.0.s8 %v725
        %v727 = vperm.slane %v713, %v726
        %v730 = vunpack.c.l.s4 1983009808
        %v731 = vunpack.c.0.s8 %v730
        %v732 = vperm.slane %v719, %v731
        %v733 = vrot.slane %v732, 4
        %vm734 = vcmask 1047556
        %v735 = vsel %vm734, %v733, %v727
        %v736 = vrot.slane %v727, 4
        %v737 = vsel %vm734, %v732, %v736
        %v739 = vunpack.c.l.s4 1934713408
        %v740 = vunpack.c.0.s8 %v739
        %v741 = vperm.slane %v735, %v740
        %v743 = vunpack.c.l.s4 1934713408
        %v744 = vunpack.c.0.s8 %v743
        %v745 = vperm.slane %v737, %v744
        %v746 = vrot.slane %v741, 4
        %v747 = vsel %vm734, 0, %v746
        %v748 = vrot.slane %v745, 4
        %v749 = vsel %vm734, 0, %v748
        %v752 = vunpack.c.l.s4 1983009808
        %v753 = vunpack.c.0.s8 %v752
        %v754 = vperm.slane %v716, %v753
        %v757 = vunpack.c.l.s4 1983009808
        %v758 = vunpack.c.0.s8 %v757
        %v759 = vperm.slane %v722, %v758
        %v760 = vrot.slane %v759, 4
        %v761 = vsel %vm734, %v760, %v754
        %v762 = vrot.slane %v754, 4
        %v763 = vsel %vm734, %v759, %v762
        %v765 = vunpack.c.l.s4 1934713408
        %v766 = vunpack.c.0.s8 %v765
        %v767 = vperm.slane %v761, %v766
        %v769 = vunpack.c.l.s4 1934713408
        %v770 = vunpack.c.0.s8 %v769
        %v771 = vperm.slane %v763, %v770
        %v772 = vrot.slane %v767, 4
        %v773 = vsel %vm734, 0, %v772
        %v774 = vrot.slane %v771, 4
        %v775 = vsel %vm734, 0, %v774
        %v776 = vsel %vm734, %v748, %v741
        %v778 = vunpack.c.l.s4 1983009808
        %v779 = vunpack.c.0.s8 %v778
        %v780 = vperm.slane %v776, %v779
        %v781 = vrot.slane %v749, 4
        %v782 = vsel %vm734, %v781, %v747
        %v784 = vunpack.c.l.s4 1983009808
        %v785 = vunpack.c.0.s8 %v784
        %v786 = vperm.slane %v782, %v785
        %v787 = vrot.slane %v786, 4
        %v788 = vsel %vm734, %v787, %v780
        %v790 = vunpack.c.l.s4 1934713408
        %v791 = vunpack.c.0.s8 %v790
        %v792 = vperm.slane %v788, %v791
        %v793 = vrot.slane %v792, 4
        %v794 = vsel %vm734, 0, %v793
        %v795 = vsel %vm734, %v774, %v767
        %v797 = vunpack.c.l.s4 1983009808
        %v798 = vunpack.c.0.s8 %v797
        %v799 = vperm.slane %v795, %v798
        %v800 = vrot.slane %v775, 4
        %v801 = vsel %vm734, %v800, %v773
        %v803 = vunpack.c.l.s4 1983009808
        %v804 = vunpack.c.0.s8 %v803
        %v805 = vperm.slane %v801, %v804
        %v806 = vrot.slane %v805, 4
        %v807 = vsel %vm734, %v806, %v799
        %v809 = vunpack.c.l.s4 1934713408
        %v810 = vunpack.c.0.s8 %v809
        %v811 = vperm.slane %v807, %v810
        %v812 = vrot.slane %v811, 4
        %v813 = vsel %vm734, 0, %v812
        %v816 = vpack.i.b16 %v811, %v792
        %v817 = vshrl.u32 %v792, 16
        %v818 = vshrl.u32 %v811, 16
        %v819 = vpack.i.b16 %v818, %v817
        %v822 = vpack.i.b16 %v813, %v794
        %v823 = vshrl.u32 %v794, 16
        %v824 = vshrl.u32 %v813, 16
        %v825 = vpack.i.b16 %v824, %v823
        %826 = vrot.lane.b32.xlu0 %v629, 120
        %v827 = vpop.permute.xlu0 %826
        %828 = vrot.lane.b32.xlu0 %v629, 112
        %v829 = vpop.permute.xlu0 %828
        %830 = vrot.lane.b32.xlu0 %v629, 104
        %v831 = vpop.permute.xlu0 %830
        %832 = vrot.lane.b32.xlu0 %v629, 96
        %v833 = vpop.permute.xlu0 %832
        %834 = vrot.lane.b32.xlu0 %v827, 96
        %v835 = vpop.permute.xlu0 %834
        %836 = vrot.lane.b32.xlu0 %v829, 96
        %v837 = vpop.permute.xlu0 %836
        %838 = vrot.lane.b32.xlu0 %v831, 96
        %v839 = vpop.permute.xlu0 %838
        %v842 = vpack.i.b16 %v835, %v833
        %v843 = vshrl.u32 %v833, 16
        %v844 = vshrl.u32 %v835, 16
        %v845 = vpack.i.b16 %v844, %v843
        %v848 = vpack.i.b16 %v839, %v837
        %v849 = vshrl.u32 %v837, 16
        %v850 = vshrl.u32 %v839, 16
        %v851 = vpack.i.b16 %v850, %v849
        %v854 = vunpack.c.l.s4 1983009808
        %v855 = vunpack.c.0.s8 %v854
        %v856 = vperm.slane %v842, %v855
        %v859 = vunpack.c.l.s4 1983009808
        %v860 = vunpack.c.0.s8 %v859
        %v861 = vperm.slane %v848, %v860
        %v862 = vrot.slane %v861, 4
        %v863 = vsel %vm734, %v862, %v856
        %v864 = vrot.slane %v856, 4
        %v865 = vsel %vm734, %v861, %v864
        %v867 = vunpack.c.l.s4 1934713408
        %v868 = vunpack.c.0.s8 %v867
        %v869 = vperm.slane %v863, %v868
        %v871 = vunpack.c.l.s4 1934713408
        %v872 = vunpack.c.0.s8 %v871
        %v873 = vperm.slane %v865, %v872
        %v874 = vrot.slane %v869, 4
        %v875 = vsel %vm734, 0, %v874
        %v876 = vrot.slane %v873, 4
        %v877 = vsel %vm734, 0, %v876
        %v880 = vunpack.c.l.s4 1983009808
        %v881 = vunpack.c.0.s8 %v880
        %v882 = vperm.slane %v845, %v881
        %v885 = vunpack.c.l.s4 1983009808
        %v886 = vunpack.c.0.s8 %v885
        %v887 = vperm.slane %v851, %v886
        %v888 = vrot.slane %v887, 4
        %v889 = vsel %vm734, %v888, %v882
        %v890 = vrot.slane %v882, 4
        %v891 = vsel %vm734, %v887, %v890
        %v893 = vunpack.c.l.s4 1934713408
        %v894 = vunpack.c.0.s8 %v893
        %v895 = vperm.slane %v889, %v894
        %v897 = vunpack.c.l.s4 1934713408
        %v898 = vunpack.c.0.s8 %v897
        %v899 = vperm.slane %v891, %v898
        %v900 = vrot.slane %v895, 4
        %v901 = vsel %vm734, 0, %v900
        %v902 = vrot.slane %v899, 4
        %v903 = vsel %vm734, 0, %v902
        %v904 = vsel %vm734, %v876, %v869
        %v906 = vunpack.c.l.s4 1983009808
        %v907 = vunpack.c.0.s8 %v906
        %v908 = vperm.slane %v904, %v907
        %v909 = vrot.slane %v877, 4
        %v910 = vsel %vm734, %v909, %v875
        %v912 = vunpack.c.l.s4 1983009808
        %v913 = vunpack.c.0.s8 %v912
        %v914 = vperm.slane %v910, %v913
        %v915 = vrot.slane %v914, 4
        %v916 = vsel %vm734, %v915, %v908
        %v918 = vunpack.c.l.s4 1934713408
        %v919 = vunpack.c.0.s8 %v918
        %v920 = vperm.slane %v916, %v919
        %v921 = vrot.slane %v920, 4
        %v922 = vsel %vm734, 0, %v921
        %v923 = vsel %vm734, %v902, %v895
        %v925 = vunpack.c.l.s4 1983009808
        %v926 = vunpack.c.0.s8 %v925
        %v927 = vperm.slane %v923, %v926
        %v928 = vrot.slane %v903, 4
        %v929 = vsel %vm734, %v928, %v901
        %v931 = vunpack.c.l.s4 1983009808
        %v932 = vunpack.c.0.s8 %v931
        %v933 = vperm.slane %v929, %v932
        %v934 = vrot.slane %v933, 4
        %v935 = vsel %vm734, %v934, %v927
        %v937 = vunpack.c.l.s4 1934713408
        %v938 = vunpack.c.0.s8 %v937
        %v939 = vperm.slane %v935, %v938
        %v940 = vrot.slane %v939, 4
        %v941 = vsel %vm734, 0, %v940
        %v944 = vpack.i.b16 %v939, %v920
        %v945 = vshrl.u32 %v920, 16
        %v946 = vshrl.u32 %v939, 16
        %v947 = vpack.i.b16 %v946, %v945
        %v950 = vpack.i.b16 %v941, %v922
        %v951 = vshrl.u32 %v922, 16
        %v952 = vshrl.u32 %v941, 16
        %v953 = vpack.i.b16 %v952, %v951
        %954 = vrot.lane.b32.xlu0 %v629, 64
        %v955 = vpop.permute.xlu0 %954
        %956 = vrot.lane.b32.xlu0 %v827, 64
        %v957 = vpop.permute.xlu0 %956
        %958 = vrot.lane.b32.xlu0 %v829, 64
        %v959 = vpop.permute.xlu0 %958
        %960 = vrot.lane.b32.xlu0 %v831, 64
        %v961 = vpop.permute.xlu0 %960
        %v964 = vpack.i.b16 %v957, %v955
        %v965 = vshrl.u32 %v955, 16
        %v966 = vshrl.u32 %v957, 16
        %v967 = vpack.i.b16 %v966, %v965
        %v970 = vpack.i.b16 %v961, %v959
        %v971 = vshrl.u32 %v959, 16
        %v972 = vshrl.u32 %v961, 16
        %v973 = vpack.i.b16 %v972, %v971
        %v976 = vunpack.c.l.s4 1983009808
        %v977 = vunpack.c.0.s8 %v976
        %v978 = vperm.slane %v964, %v977
        %v981 = vunpack.c.l.s4 1983009808
        %v982 = vunpack.c.0.s8 %v981
        %v983 = vperm.slane %v970, %v982
        %v984 = vrot.slane %v983, 4
        %v985 = vsel %vm734, %v984, %v978
        %v986 = vrot.slane %v978, 4
        %v987 = vsel %vm734, %v983, %v986
        %v989 = vunpack.c.l.s4 1934713408
        %v990 = vunpack.c.0.s8 %v989
        %v991 = vperm.slane %v985, %v990
        %v993 = vunpack.c.l.s4 1934713408
        %v994 = vunpack.c.0.s8 %v993
        %v995 = vperm.slane %v987, %v994
        %v996 = vrot.slane %v991, 4
        %v997 = vsel %vm734, 0, %v996
        %v998 = vrot.slane %v995, 4
        %v999 = vsel %vm734, 0, %v998
        %v1002 = vunpack.c.l.s4 1983009808
        %v1003 = vunpack.c.0.s8 %v1002
        %v1004 = vperm.slane %v967, %v1003
        %v1007 = vunpack.c.l.s4 1983009808
        %v1008 = vunpack.c.0.s8 %v1007
        %v1009 = vperm.slane %v973, %v1008
        %v1010 = vrot.slane %v1009, 4
        %v1011 = vsel %vm734, %v1010, %v1004
        %v1012 = vrot.slane %v1004, 4
        %v1013 = vsel %vm734, %v1009, %v1012
        %v1015 = vunpack.c.l.s4 1934713408
        %v1016 = vunpack.c.0.s8 %v1015
        %v1017 = vperm.slane %v1011, %v1016
        %v1019 = vunpack.c.l.s4 1934713408
        %v1020 = vunpack.c.0.s8 %v1019
        %v1021 = vperm.slane %v1013, %v1020
        %v1022 = vrot.slane %v1017, 4
        %v1023 = vsel %vm734, 0, %v1022
        %v1024 = vrot.slane %v1021, 4
        %v1025 = vsel %vm734, 0, %v1024
        %v1026 = vsel %vm734, %v998, %v991
        %v1028 = vunpack.c.l.s4 1983009808
        %v1029 = vunpack.c.0.s8 %v1028
        %v1030 = vperm.slane %v1026, %v1029
        %v1031 = vrot.slane %v999, 4
        %v1032 = vsel %vm734, %v1031, %v997
        %v1034 = vunpack.c.l.s4 1983009808
        %v1035 = vunpack.c.0.s8 %v1034
        %v1036 = vperm.slane %v1032, %v1035
        %v1037 = vrot.slane %v1036, 4
        %v1038 = vsel %vm734, %v1037, %v1030
        %v1040 = vunpack.c.l.s4 1934713408
        %v1041 = vunpack.c.0.s8 %v1040
        %v1042 = vperm.slane %v1038, %v1041
        %v1043 = vrot.slane %v1042, 4
        %v1044 = vsel %vm734, 0, %v1043
        %v1045 = vsel %vm734, %v1024, %v1017
        %v1047 = vunpack.c.l.s4 1983009808
        %v1048 = vunpack.c.0.s8 %v1047
        %v1049 = vperm.slane %v1045, %v1048
        %v1050 = vrot.slane %v1025, 4
        %v1051 = vsel %vm734, %v1050, %v1023
        %v1053 = vunpack.c.l.s4 1983009808
        %v1054 = vunpack.c.0.s8 %v1053
        %v1055 = vperm.slane %v1051, %v1054
        %v1056 = vrot.slane %v1055, 4
        %v1057 = vsel %vm734, %v1056, %v1049
        %v1059 = vunpack.c.l.s4 1934713408
        %v1060 = vunpack.c.0.s8 %v1059
        %v1061 = vperm.slane %v1057, %v1060
        %v1062 = vrot.slane %v1061, 4
        %v1063 = vsel %vm734, 0, %v1062
        %v1066 = vpack.i.b16 %v1061, %v1042
        %v1067 = vshrl.u32 %v1042, 16
        %v1068 = vshrl.u32 %v1061, 16
        %v1069 = vpack.i.b16 %v1068, %v1067
        %v1072 = vpack.i.b16 %v1063, %v1044
        %v1073 = vshrl.u32 %v1044, 16
        %v1074 = vshrl.u32 %v1063, 16
        %v1075 = vpack.i.b16 %v1074, %v1073
        %vm1076 = vcmask 64512
        %v1078 = vsel %vm1076, %v816, 0
        %v1081 = vsel %vm1076, %v944, 0
        %1083 = vmatpush.bf16.xpose.msra.mxu0 0
        %1084 = vmatpush.bf16.xpose.msra.mxu0 0
        %1085 = vmatpush.bf16.xpose.msra.mxu0 0
        %1086 = vmatpush.bf16.xpose.msra.mxu0 0
        %1087 = vmatpush.bf16.xpose.msra.mxu0 0
        %1088 = vmatpush.bf16.xpose.msra.mxu0 0
        %1089 = vmatpush.bf16.xpose.msra.mxu0 0
        %1090 = vmatpush.bf16.xpose.msra.mxu0 %v1081
        %1091 = vmatmul.bf16.gmra.mxu0 %v1078
        %v1092 = vpop.f32.mrf.mxu0
        %v1093 = vadd.f32 0.0, %v1092
        %v1094 = vpop.f32.mrf.mxu0
        %1095 = vdwg.mxu0
        %v1097 = vsel %vm1076, %v819, 0
        %v1100 = vsel %vm1076, %v947, 0
        %1102 = vmatpush.bf16.xpose.msra.mxu0 0
        %1103 = vmatpush.bf16.xpose.msra.mxu0 0
        %1104 = vmatpush.bf16.xpose.msra.mxu0 0
        %1105 = vmatpush.bf16.xpose.msra.mxu0 0
        %1106 = vmatpush.bf16.xpose.msra.mxu0 0
        %1107 = vmatpush.bf16.xpose.msra.mxu0 0
        %1108 = vmatpush.bf16.xpose.msra.mxu0 0
        %1109 = vmatpush.bf16.xpose.msra.mxu0 %v1100
        %1110 = vmatmul.bf16.gmra.mxu0 %v1097
        %v1111 = vpop.f32.mrf.mxu0
        %v1112 = vadd.f32 0.0, %v1111
        %v1113 = vpop.f32.mrf.mxu0
        %1114 = vdwg.mxu0
        %v1116 = vsel %vm1076, %v822, 0
        %v1119 = vsel %vm1076, %v950, 0
        %1121 = vmatpush.bf16.xpose.msra.mxu0 0
        %1122 = vmatpush.bf16.xpose.msra.mxu0 0
        %1123 = vmatpush.bf16.xpose.msra.mxu0 0
        %1124 = vmatpush.bf16.xpose.msra.mxu0 0
        %1125 = vmatpush.bf16.xpose.msra.mxu0 0
        %1126 = vmatpush.bf16.xpose.msra.mxu0 0
        %1127 = vmatpush.bf16.xpose.msra.mxu0 0
        %1128 = vmatpush.bf16.xpose.msra.mxu0 %v1119
        %1129 = vmatmul.bf16.gmra.mxu0 %v1116
        %v1130 = vpop.f32.mrf.mxu0
        %v1131 = vadd.f32 0.0, %v1130
        %v1132 = vpop.f32.mrf.mxu0
        %1133 = vdwg.mxu0
        %v1135 = vsel %vm1076, %v825, 0
        %v1138 = vsel %vm1076, %v953, 0
        %1140 = vmatpush.bf16.xpose.msra.mxu0 0
        %1141 = vmatpush.bf16.xpose.msra.mxu0 0
        %1142 = vmatpush.bf16.xpose.msra.mxu0 0
        %1143 = vmatpush.bf16.xpose.msra.mxu0 0
        %1144 = vmatpush.bf16.xpose.msra.mxu0 0
        %1145 = vmatpush.bf16.xpose.msra.mxu0 0
        %1146 = vmatpush.bf16.xpose.msra.mxu0 0
        %1147 = vmatpush.bf16.xpose.msra.mxu0 %v1138
        %1148 = vmatmul.bf16.gmra.mxu0 %v1135
        %v1149 = vpop.f32.mrf.mxu0
        %v1150 = vadd.f32 0.0, %v1149
        %v1151 = vpop.f32.mrf.mxu0
        %1152 = vdwg.mxu0
        %v1153 = vsel %vm1076, %v1093, -inf
        %1154 = vmax.xlane.f32.xlu0 %v1153
        %v1155 = vpop.xlane.xlu0 %1154
        %v1156 = vsel %vm1076, %v1112, -inf
        %1157 = vmax.xlane.f32.xlu0 %v1156
        %v1158 = vpop.xlane.xlu0 %1157
        %v1159 = vsel %vm1076, %v1131, -inf
        %1160 = vmax.xlane.f32.xlu0 %v1159
        %v1161 = vpop.xlane.xlu0 %1160
        %v1162 = vsel %vm1076, %v1150, -inf
        %1163 = vmax.xlane.f32.xlu0 %v1162
        %v1164 = vpop.xlane.xlu0 %1163
        %v1165 = vsub.f32 %v1093, %v1155
        %v1166 = vsub.f32 %v1112, %v1158
        %v1167 = vsub.f32 %v1131, %v1161
        %v1168 = vsub.f32 %v1150, %v1164
        %v1169 = vmul.f32 %v1165, 1.442695
        %v1170 = vpow.pop %v1169
        %v1171 = vmul.f32 %v1166, 1.442695
        %v1172 = vpow.pop %v1171
        %v1173 = vmul.f32 %v1167, 1.442695
        %v1174 = vpow.pop %v1173
        %v1175 = vmul.f32 %v1168, 1.442695
        %v1176 = vpow.pop %v1175
        %v1177 = vsel %vm1076, %v1170, 0.0
        %1178 = vadd.xlane.f32.xlu0 %v1177
        %v1179 = vpop.xlane.xlu0 %1178
        %v1180 = vsel %vm1076, %v1172, 0.0
        %1181 = vadd.xlane.f32.xlu0 %v1180
        %v1182 = vpop.xlane.xlu0 %1181
        %v1183 = vsel %vm1076, %v1174, 0.0
        %1184 = vadd.xlane.f32.xlu0 %v1183
        %v1185 = vpop.xlane.xlu0 %1184
        %v1186 = vsel %vm1076, %v1176, 0.0
        %1187 = vadd.xlane.f32.xlu0 %v1186
        %v1188 = vpop.xlane.xlu0 %1187
        %v1189 = vrcp.pop %v1179
        %v1190 = vrcp.pop %v1182
        %v1191 = vrcp.pop %v1185
        %v1192 = vrcp.pop %v1188
        %v1193 = vmul.f32 %v1170, %v1189
        %v1194 = vmul.f32 %v1172, %v1190
        %v1195 = vmul.f32 %v1174, %v1191
        %v1196 = vmul.f32 %v1176, %v1192
        %v1197 = vpack.c.bf16 %v1193, %v1193
        %v1198 = vpack.c.bf16 %v1194, %v1194
        %v1199 = vpack.c.bf16 %v1195, %v1195
        %v1200 = vpack.c.bf16 %v1196, %v1196
        %v1202 = vsel %vm1076, %v1197, 0
        %vm1204 = vcmask 1043456
        %v1206 = vsel %vm1204, %v1066, 0
        %1208 = vmatpush.bf16.msra.mxu0 0
        %1209 = vmatpush.bf16.msra.mxu0 0
        %1210 = vmatpush.bf16.msra.mxu0 0
        %1211 = vmatpush.bf16.msra.mxu0 0
        %1212 = vmatpush.bf16.msra.mxu0 0
        %1213 = vmatpush.bf16.msra.mxu0 0
        %1214 = vmatpush.bf16.msra.mxu0 0
        %1215 = vmatpush.bf16.msra.mxu0 %v1206
        %1216 = vmatmul.bf16.gmra.mxu0 %v1202
        %v1217 = vpop.f32.mrf.mxu0
        %v1218 = vadd.f32 0.0, %v1217
        %v1219 = vpop.f32.mrf.mxu0
        %1220 = vdwg.mxu0
        %v1222 = vsel %vm1076, %v1198, 0
        %v1225 = vsel %vm1204, %v1069, 0
        %1227 = vmatpush.bf16.msra.mxu0 0
        %1228 = vmatpush.bf16.msra.mxu0 0
        %1229 = vmatpush.bf16.msra.mxu0 0
        %1230 = vmatpush.bf16.msra.mxu0 0
        %1231 = vmatpush.bf16.msra.mxu0 0
        %1232 = vmatpush.bf16.msra.mxu0 0
        %1233 = vmatpush.bf16.msra.mxu0 0
        %1234 = vmatpush.bf16.msra.mxu0 %v1225
        %1235 = vmatmul.bf16.gmra.mxu0 %v1222
        %v1236 = vpop.f32.mrf.mxu0
        %v1237 = vadd.f32 0.0, %v1236
        %v1238 = vpop.f32.mrf.mxu0
        %1239 = vdwg.mxu0
        %v1241 = vsel %vm1076, %v1199, 0
        %v1244 = vsel %vm1204, %v1072, 0
        %1246 = vmatpush.bf16.msra.mxu0 0
        %1247 = vmatpush.bf16.msra.mxu0 0
        %1248 = vmatpush.bf16.msra.mxu0 0
        %1249 = vmatpush.bf16.msra.mxu0 0
        %1250 = vmatpush.bf16.msra.mxu0 0
        %1251 = vmatpush.bf16.msra.mxu0 0
        %1252 = vmatpush.bf16.msra.mxu0 0
        %1253 = vmatpush.bf16.msra.mxu0 %v1244
        %1254 = vmatmul.bf16.gmra.mxu0 %v1241
        %v1255 = vpop.f32.mrf.mxu0
        %v1256 = vadd.f32 0.0, %v1255
        %v1257 = vpop.f32.mrf.mxu0
        %1258 = vdwg.mxu0
        %v1260 = vsel %vm1076, %v1200, 0
        %v1263 = vsel %vm1204, %v1075, 0
        %1265 = vmatpush.bf16.msra.mxu0 0
        %1266 = vmatpush.bf16.msra.mxu0 0
        %1267 = vmatpush.bf16.msra.mxu0 0
        %1268 = vmatpush.bf16.msra.mxu0 0
        %1269 = vmatpush.bf16.msra.mxu0 0
        %1270 = vmatpush.bf16.msra.mxu0 0
        %1271 = vmatpush.bf16.msra.mxu0 0
        %1272 = vmatpush.bf16.msra.mxu0 %v1263
        %1273 = vmatmul.bf16.gmra.mxu0 %v1260
        %v1274 = vpop.f32.mrf.mxu0
        %v1275 = vadd.f32 0.0, %v1274
        %v1276 = vpop.f32.mrf.mxu0
        %1277 = vdwg.mxu0
        %v1278 = vrot.slane %v1256, 4
        %vm1279 = vcmask 1047556
        %v1280 = vsel %vm1279, %v1278, %v1218
        %v1281 = vrot.slane %v1218, 4
        %v1282 = vsel %vm1279, %v1256, %v1281
        %v1284 = vunpack.c.l.s4 1983009808
        %v1285 = vunpack.c.0.s8 %v1284
        %v1286 = vperm.slane %v1280, %v1285
        %v1288 = vunpack.c.l.s4 1983009808
        %v1289 = vunpack.c.0.s8 %v1288
        %v1290 = vperm.slane %v1282, %v1289
        %v1291 = vrot.slane %v1275, 4
        %v1292 = vsel %vm1279, %v1291, %v1237
        %v1293 = vrot.slane %v1237, 4
        %v1294 = vsel %vm1279, %v1275, %v1293
        %v1296 = vunpack.c.l.s4 1983009808
        %v1297 = vunpack.c.0.s8 %v1296
        %v1298 = vperm.slane %v1292, %v1297
        %v1300 = vunpack.c.l.s4 1983009808
        %v1301 = vunpack.c.0.s8 %v1300
        %v1302 = vperm.slane %v1294, %v1301
        %v1303 = vrot.slane %v1298, 4
        %v1304 = vsel %vm1279, %v1303, %v1286
        %v1305 = vrot.slane %v1286, 4
        %v1306 = vsel %vm1279, %v1298, %v1305
        %v1308 = vunpack.c.l.s4 1934713408
        %v1309 = vunpack.c.0.s8 %v1308
        %v1310 = vperm.slane %v1304, %v1309
        %v1312 = vunpack.c.l.s4 1934713408
        %v1313 = vunpack.c.0.s8 %v1312
        %v1314 = vperm.slane %v1306, %v1313
        %v1315 = vrot.slane %v1302, 4
        %v1316 = vsel %vm1279, %v1315, %v1290
        %v1317 = vrot.slane %v1290, 4
        %v1318 = vsel %vm1279, %v1302, %v1317
        %v1320 = vunpack.c.l.s4 1934713408
        %v1321 = vunpack.c.0.s8 %v1320
        %v1322 = vperm.slane %v1316, %v1321
        %v1324 = vunpack.c.l.s4 1934713408
        %v1325 = vunpack.c.0.s8 %v1324
        %v1326 = vperm.slane %v1318, %v1325
        %v1327 = vrot.slane %v1310, 4
        %v1328 = vsel %vm1279, 0.0, %v1327
        %v1329 = vrot.slane %v1314, 4
        %v1330 = vsel %vm1279, 0.0, %v1329
        %v1331 = vrot.slane %v1322, 4
        %v1332 = vsel %vm1279, 0.0, %v1331
        %v1333 = vrot.slane %v1326, 4
        %v1334 = vsel %vm1279, 0.0, %v1333
        %v1335 = vsel %vm1279, %v1329, %v1310
        %v1337 = vunpack.c.l.s4 1983009808
        %v1338 = vunpack.c.0.s8 %v1337
        %v1339 = vperm.slane %v1335, %v1338
        %v1340 = vrot.slane %v1330, 4
        %v1341 = vsel %vm1279, %v1340, %v1328
        %v1343 = vunpack.c.l.s4 1983009808
        %v1344 = vunpack.c.0.s8 %v1343
        %v1345 = vperm.slane %v1341, %v1344
        %v1346 = vsel %vm1279, %v1333, %v1322
        %v1348 = vunpack.c.l.s4 1983009808
        %v1349 = vunpack.c.0.s8 %v1348
        %v1350 = vperm.slane %v1346, %v1349
        %v1351 = vrot.slane %v1334, 4
        %v1352 = vsel %vm1279, %v1351, %v1332
        %v1354 = vunpack.c.l.s4 1983009808
        %v1355 = vunpack.c.0.s8 %v1354
        %v1356 = vperm.slane %v1352, %v1355
        %v1357 = vrot.slane %v1345, 4
        %v1358 = vsel %vm1279, %v1357, %v1339
        %v1359 = vrot.slane %v1339, 4
        %v1360 = vsel %vm1279, %v1345, %v1359
        %v1362 = vunpack.c.l.s4 1934713408
        %v1363 = vunpack.c.0.s8 %v1362
        %v1364 = vperm.slane %v1358, %v1363
        %v1366 = vunpack.c.l.s4 1934713408
        %v1367 = vunpack.c.0.s8 %v1366
        %v1368 = vperm.slane %v1360, %v1367
        %v1369 = vrot.slane %v1356, 4
        %v1370 = vsel %vm1279, %v1369, %v1350
        %v1371 = vrot.slane %v1350, 4
        %v1372 = vsel %vm1279, %v1356, %v1371
        %v1374 = vunpack.c.l.s4 1934713408
        %v1375 = vunpack.c.0.s8 %v1374
        %v1376 = vperm.slane %v1370, %v1375
        %v1378 = vunpack.c.l.s4 1934713408
        %v1379 = vunpack.c.0.s8 %v1378
        %v1380 = vperm.slane %v1372, %v1379
        %v1381 = vrot.slane %v1376, 4
        %v1382 = vsel %vm1279, %v1381, %v1364
        %v1383 = vrot.slane %v1364, 4
        %v1384 = vsel %vm1279, %v1376, %v1383
        %v1385 = vrot.slane %v1380, 4
        %v1386 = vsel %vm1279, %v1385, %v1368
        %v1387 = vrot.slane %v1368, 4
        %v1388 = vsel %vm1279, %v1380, %v1387
        %1390 = vrot.lane.b32.xlu0 %v1384, 8
        %v1391 = vpop.permute.xlu0 %1390
        %1394 = vrot.lane.b32.xlu0 %v1386, 16
        %v1395 = vpop.permute.xlu0 %1394
        %1398 = vrot.lane.b32.xlu0 %v1388, 24
        %v1399 = vpop.permute.xlu0 %1398
        %v1401 = vsel %vm1076, %v1382, %v1391
        %vm1402 = vcmask 130048
        %v1403 = vsel %vm1402, %v1401, %v1395
        %vm1404 = vcmask 195584
        %v1405 = vsel %vm1404, %v1403, %v1399
        %v1406 = vpack.c.bf16 %v1405, %v1405
        %v1408 = vsel %vm549, %v1406, 0
        %1410 = vmatpush.bf16.msra.mxu0 0
        %1411 = vmatpush.bf16.msra.mxu0 0
        %1412 = vmatpush.bf16.msra.mxu0 0
        %1413 = vmatpush.bf16.msra.mxu0 0
        %1414 = vmatpush.bf16.msra.mxu0 0
        %1415 = vmatpush.bf16.msra.mxu0 0
        %1416 = vmatpush.bf16.msra.mxu0 %v642
        %1417 = vmatpush.bf16.msra.mxu0 %v641
        %1418 = vmatmul.bf16.gmra.mxu0 %v1408
        %v1419 = vpop.f32.mrf.mxu0
        %v1420 = vadd.f32 %v631, %v1419
        %v1421 = vpop.f32.mrf.mxu0
        %1422 = vdwg.mxu0
        %v1423 = vadd.f32 %v546, %v1420
        %v1424 = vld [vmem:[%s7] sm:$0x1]
        %v1425 = vld [vmem:[%s8] sm:$0x1]
        %v1426 = vsel %vm549, %v1423, 0.0
        %1427 = vadd.xlane.f32.xlu0 %v1426
        %v1428 = vpop.xlane.xlu0 %1427
        %v1429 = vmul.f32 %v1428, %v559
        %v1430 = vsub.f32 %v1423, %v1429
        %v1431 = vmul.f32 %v1430, %v1430
        %v1432 = vsel %vm549, %v1431, 0.0
        %1433 = vadd.xlane.f32.xlu0 %v1432
        %v1434 = vpop.xlane.xlu0 %1433
        %v1435 = vmul.f32 %v1434, %v559
        %v1436 = vadd.f32 %v1435, 1e-05
        %v1437 = vrsqrt.pop %v1436
        %v1438 = vmul.f32 %v1437, %v1436
        %v1439 = vmul.f32 %v1438, %v1437
        %v1440 = vmul.f32 0.5, %v1439
        %v1441 = vsub.f32 1.5, %v1440
        %v1442 = vmul.f32 %v1437, %v1441
        %vm1443 = vweird.f32 %v1436
        %vm1444 = vweird.f32 %v1437
        %vm1445 = vmor %vm1443, %vm1444
        %v1446 = vsel %vm1445, %v1437, %v1442
        %v1447 = vmul.f32 %v1430, %v1446
        %v1449 = vperm.slane %v1424, 0
        %v1451 = vmul.f32 %v1447, %v1449
        %v1453 = vperm.slane %v1425, 0
        %v1455 = vadd.f32 %v1451, %v1453
        %v1456 = vpack.c.bf16 %v1455, %v1455
        %v1457 = vld [vmem:[%s9] sm:$0xf]
        %v1458 = vld [vmem:[%s9 + $0x4] sm:$0xf]
        %v1459 = vld [vmem:[%s9 + $0x8] sm:$0xf]
        %v1460 = vld [vmem:[%s9 + $0xc] sm:$0xf]
        %v1461 = vld [vmem:[%s10] sm:$0x1]
        %v1463 = vperm.slane %v1461, 0
        %v1469 = vunpack.c.l.b16 %v1457
        %v1470 = vunpack.c.l.b16 %v1458
        %v1471 = vunpack.c.l.b16 %v1459
        %v1472 = vunpack.c.l.b16 %v1460
        %v1473 = vpack.c.b16 %v1470, %v1469
        %v1474 = vpack.c.b16 %v1472, %v1471
        %v1478 = vsel %vm549, %v1456, 0
        %1480 = vmatpush.bf16.msra.mxu0 0
        %1481 = vmatpush.bf16.msra.mxu0 0
        %1482 = vmatpush.bf16.msra.mxu0 0
        %1483 = vmatpush.bf16.msra.mxu0 0
        %1484 = vmatpush.bf16.msra.mxu0 0
        %1485 = vmatpush.bf16.msra.mxu0 0
        %1486 = vmatpush.bf16.msra.mxu0 %v1474
        %1487 = vmatpush.bf16.msra.mxu0 %v1473
        %1488 = vmatmul.bf16.gmra.mxu0 %v1478
        %v1489 = vpop.f32.mrf.mxu0
        %v1490 = vadd.f32 %v1463, %v1489
        %v1491 = vpop.f32.mrf.mxu0
        %1492 = vdwg.mxu0
        %v1493 = vmul.f32 %v1490, 1.702
        %v1494 = vxor.u32 %v1493, 2147483648
        %v1495 = vmul.f32 %v1494, 1.442695
        %v1496 = vpow.pop %v1495
        %v1497 = vadd.f32 %v1496, 1.0
        %v1498 = vrcp.pop %v1497
        %v1499 = vmul.f32 %v1497, %v1498
        %v1500 = vsub.f32 1.0, %v1499
        %v1501 = vmul.f32 %v1498, %v1500
        %v1502 = vadd.f32 %v1498, %v1501
        %vm1503 = vweird.f32 %v1497
        %vm1504 = vweird.f32 %v1498
        %vm1505 = vmor %vm1503, %vm1504
        %v1506 = vsel %vm1505, %v1498, %v1502
        %v1507 = vand.u32 2147483647, %v1497
        %vm1508 = vcmp.eq.f32.partialorder %v1507, 8.507059e+37
        %v1509 = vand.u32 %v1497, 2147483648
        %v1510 = vor.u32 1.1754944e-38, %v1509
        %v1511 = vsel %vm1508, %v1510, %v1506
        %v1512 = vmul.f32 1.0, %v1511
        %v1513 = vmul.f32 %v1490, %v1512
        %v1514 = vpack.c.bf16 %v1513, %v1513
        %v1515 = vld [vmem:[%s11] sm:$0xf]
        %v1516 = vld [vmem:[%s11 + $0x4] sm:$0xf]
        %v1517 = vld [vmem:[%s11 + $0x8] sm:$0xf]
        %v1518 = vld [vmem:[%s11 + $0xc] sm:$0xf]
        %v1519 = vld [vmem:[%s11 + $0x10] sm:$0xf]
        %v1520 = vld [vmem:[%s11 + $0x14] sm:$0xf]
        %v1521 = vld [vmem:[%s11 + $0x18] sm:$0xf]
        %v1522 = vld [vmem:[%s11 + $0x1c] sm:$0xf]
        %v1523 = vld [vmem:[%s11 + $0x20] sm:$0xf]
        %v1524 = vld [vmem:[%s11 + $0x24] sm:$0xf]
        %v1525 = vld [vmem:[%s11 + $0x28] sm:$0xf]
        %v1526 = vld [vmem:[%s11 + $0x2c] sm:$0xf]
        %v1527 = vld [vmem:[%s11 + $0x30] sm:$0xf]
        %v1528 = vld [vmem:[%s11 + $0x34] sm:$0xf]
        %v1529 = vld [vmem:[%s11 + $0x38] sm:$0xf]
        %v1530 = vld [vmem:[%s11 + $0x3c] sm:$0xf]
        %v1531 = vld [vmem:[%s12] sm:$0x1]
        %v1533 = vperm.slane %v1531, 0
        %v1551 = vunpack.c.l.b16 %v1515
        %v1552 = vunpack.c.l.b16 %v1516
        %v1553 = vunpack.c.l.b16 %v1517
        %v1554 = vunpack.c.l.b16 %v1518
        %v1555 = vunpack.c.l.b16 %v1519
        %v1556 = vunpack.c.l.b16 %v1520
        %v1557 = vunpack.c.l.b16 %v1521
        %v1558 = vunpack.c.l.b16 %v1522
        %v1559 = vunpack.c.l.b16 %v1523
        %v1560 = vunpack.c.l.b16 %v1524
        %v1561 = vunpack.c.l.b16 %v1525
        %v1562 = vunpack.c.l.b16 %v1526
        %v1563 = vunpack.c.l.b16 %v1527
        %v1564 = vunpack.c.l.b16 %v1528
        %v1565 = vunpack.c.l.b16 %v1529
        %v1566 = vunpack.c.l.b16 %v1530
        %v1567 = vpack.c.b16 %v1552, %v1551
        %v1568 = vpack.c.b16 %v1554, %v1553
        %v1569 = vpack.c.b16 %v1556, %v1555
        %v1570 = vpack.c.b16 %v1558, %v1557
        %v1571 = vpack.c.b16 %v1560, %v1559
        %v1572 = vpack.c.b16 %v1562, %v1561
        %v1573 = vpack.c.b16 %v1564, %v1563
        %v1574 = vpack.c.b16 %v1566, %v1565
        %1583 = vmatpush.bf16.msra.mxu0 %v1574
        %1584 = vmatpush.bf16.msra.mxu0 %v1573
        %1585 = vmatpush.bf16.msra.mxu0 %v1572
        %1586 = vmatpush.bf16.msra.mxu0 %v1571
        %1587 = vmatpush.bf16.msra.mxu0 %v1570
        %1588 = vmatpush.bf16.msra.mxu0 %v1569
        %1589 = vmatpush.bf16.msra.mxu0 %v1568
        %1590 = vmatpush.bf16.msra.mxu0 %v1567
        %1591 = vmatmul.bf16.gmra.mxu0 %v1514
        %v1592 = vpop.f32.mrf.mxu0
        %v1593 = vadd.f32 %v1533, %v1592
        %v1594 = vpop.f32.mrf.mxu0
        %1595 = vdwg.mxu0
        %v1596 = vadd.f32 %v1423, %v1593
        %1597 = vst.msk [vmem:[%s519] sm:$0xff] %vm549, %v1596
        %v1598 = vadd.f32 %v699, %v1596
        %1599 = vst.msk [vmem:[%s540] sm:$0xff] %vm549, %v1598
        %s1600 = sand.u32 %s323, 1
        %s1601 = scalar_lea.sflag [#allocation3], %s1600
        %s1602 = sand.u32 %s323, 1
        %s1603 = smul.addr %s1602, 8
        %s1604 = scalar_lea.vmem [#allocation2], %s1603
        %s1605 = sand.u32 %s37, 1
        %s1606 = scalar_lea.sflag [#allocation5], %s1605
        %s1607 = sand.u32 %s349, 1
        %s1608 = smul.addr %s1607, 8
        %s1609 = scalar_lea.vmem [#allocation4], %s1608
        %s1610 = sand.u32 %s37, 1
        %s1611 = scalar_lea.sflag [#allocation5], %s1610
        %s1612 = sand.u32 %s375, 1
        %s1613 = smul.addr %s1612, 8
        %s1614 = scalar_lea.vmem [#allocation6], %s1613
        %s1615 = sand.u32 %s401, 1
        %s1616 = scalar_lea.sflag [#allocation8], %s1615
        %s1617 = sand.u32 %s401, 1
        %s1618 = smul.addr %s1617, 8
        %s1619 = scalar_lea.vmem [#allocation7], %s1618
        // Predicated region
        $region73: #{tpu_custom_call.1} parent=71 // pred_check
          %p1620 = pneg %p333
        $region74: #{tpu_custom_call.1} parent=71 // pred_check_branch
          %1622 = sbr.rel (%p1620) target = $region76
        $region75: #{tpu_custom_call.1} parent=71 // pred_region
          %1624 = vsyncadd %s1601, 0
          %s1625 = smul.addr %s37, 8
          %s1626 = scalar_lea.hbm %s13, %s1625
          %s1628 = sshll.u32 %s1604, 4
          %s1629 = int_to_ptr.vmem [resolvable:$true] %s1628
          %s1630 = sshll.u32 %s1626, 4
          %s1631 = int_to_ptr.hbm [resolvable:$true] %s1630
          %1633 = dma.vmem_to_hbm [thread:$0]  %s1629, 128, %s1631, %s1601
        $region76: #{tpu_custom_call.1} parent=71 // pred_fallthru
          _
        // Predicated region
        $region77: #{tpu_custom_call.1} parent=71 // pred_check
          %p1634 = pneg %p359
        $region78: #{tpu_custom_call.1} parent=71 // pred_check_branch
          %1636 = sbr.rel (%p1634) target = $region80
        $region79: #{tpu_custom_call.1} parent=71 // pred_region
          %1638 = vsyncadd %s1606, 0
          %s1639 = smul.addr %s37, 8
          %s1640 = scalar_lea.hbm %s14, %s1639
          %s1642 = sshll.u32 %s1609, 4
          %s1643 = int_to_ptr.vmem [resolvable:$true] %s1642
          %s1644 = sshll.u32 %s1640, 4
          %s1645 = int_to_ptr.hbm [resolvable:$true] %s1644
          %1647 = dma.vmem_to_hbm [thread:$0]  %s1643, 128, %s1645, %s1606
        $region80: #{tpu_custom_call.1} parent=71 // pred_fallthru
          _
        // Predicated region
        $region81: #{tpu_custom_call.1} parent=71 // pred_check
          %p1648 = pneg %p385
        $region82: #{tpu_custom_call.1} parent=71 // pred_check_branch
          %1650 = sbr.rel (%p1648) target = $region84
        $region83: #{tpu_custom_call.1} parent=71 // pred_region
          %1652 = vsyncadd %s1611, 0
          %s1653 = smul.addr %s37, 8
          %s1654 = scalar_lea.hbm %s15, %s1653
          %s1656 = sshll.u32 %s1614, 4
          %s1657 = int_to_ptr.vmem [resolvable:$true] %s1656
          %s1658 = sshll.u32 %s1654, 4
          %s1659 = int_to_ptr.hbm [resolvable:$true] %s1658
          %1661 = dma.vmem_to_hbm [thread:$0]  %s1657, 128, %s1659, %s1611
        $region84: #{tpu_custom_call.1} parent=71 // pred_fallthru
          _
        // Predicated region
        $region85: #{tpu_custom_call.1} parent=71 // pred_check
          %p1662 = pneg %p411
        $region86: #{tpu_custom_call.1} parent=71 // pred_check_branch
          %1664 = sbr.rel (%p1662) target = $region88
        $region87: #{tpu_custom_call.1} parent=71 // pred_region
          %1666 = vsyncadd %s1616, 0
          %s1667 = smul.addr %s37, 8
          %s1668 = scalar_lea.hbm %s16, %s1667
          %s1670 = sshll.u32 %s1619, 4
          %s1671 = int_to_ptr.vmem [resolvable:$true] %s1670
          %s1672 = sshll.u32 %s1668, 4
          %s1673 = int_to_ptr.hbm [resolvable:$true] %s1672
          %1675 = dma.vmem_to_hbm [thread:$0]  %s1671, 128, %s1673, %s1616
        $region88: #{tpu_custom_call.1} parent=71 // pred_fallthru
          _
      $region72: #{tpu_custom_call.1} parent=5 // pred_fallthru
        _
      %p1676 = scmp.le.s32.totalorder 2, %s32
      // Predicated region
      $region89: #{tpu_custom_call.1} parent=5 // pred_check
        %p1677 = pneg %p1676
      $region90: #{tpu_custom_call.1} parent=5 // pred_check_branch
        %1679 = sbr.rel (%p1677) target = $region92
      $region91: #{tpu_custom_call.1} parent=5 // pred_region
        %s1680 = ssub.s32 %s32, 2
        // Predicated region
        $region93: #{tpu_custom_call.1} parent=91 // pred_check
          %p1681 = pneg %p339
        $region94: #{tpu_custom_call.1} parent=91 // pred_check_branch
          %1683 = sbr.rel (%p1681) target = $region96
        $region95: #{tpu_custom_call.1} parent=91 // pred_region
          %s1684 = sand.u32 %s324, 1
          %s1685 = scalar_lea.sflag [#allocation3], %s1684
          %s1686 = sand.u32 %s324, 1
          %s1687 = smul.addr %s1686, 8
          %s1688 = scalar_lea.vmem [#allocation2], %s1687
          %1690 = dma.done %s1685, 128
        $region96: #{tpu_custom_call.1} parent=91 // pred_fallthru
          _
        // Predicated region
        $region97: #{tpu_custom_call.1} parent=91 // pred_check
          %p1691 = pneg %p365
        $region98: #{tpu_custom_call.1} parent=91 // pred_check_branch
          %1693 = sbr.rel (%p1691) target = $region100
        $region99: #{tpu_custom_call.1} parent=91 // pred_region
          %s1694 = sand.u32 %s38, 1
          %s1695 = scalar_lea.sflag [#allocation5], %s1694
          %s1696 = sand.u32 %s350, 1
          %s1697 = smul.addr %s1696, 8
          %s1698 = scalar_lea.vmem [#allocation4], %s1697
          %1700 = dma.done %s1695, 128
        $region100: #{tpu_custom_call.1} parent=91 // pred_fallthru
          _
        // Predicated region
        $region101: #{tpu_custom_call.1} parent=91 // pred_check
          %p1701 = pneg %p391
        $region102: #{tpu_custom_call.1} parent=91 // pred_check_branch
          %1703 = sbr.rel (%p1701) target = $region104
        $region103: #{tpu_custom_call.1} parent=91 // pred_region
          %s1704 = sand.u32 %s38, 1
          %s1705 = scalar_lea.sflag [#allocation5], %s1704
          %s1706 = sand.u32 %s376, 1
          %s1707 = smul.addr %s1706, 8
          %s1708 = scalar_lea.vmem [#allocation6], %s1707
          %1710 = dma.done %s1705, 128
        $region104: #{tpu_custom_call.1} parent=91 // pred_fallthru
          _
        // Predicated region
        $region105: #{tpu_custom_call.1} parent=91 // pred_check
          %p1711 = pneg %p417
        $region106: #{tpu_custom_call.1} parent=91 // pred_check_branch
          %1713 = sbr.rel (%p1711) target = $region108
        $region107: #{tpu_custom_call.1} parent=91 // pred_region
          %s1714 = sand.u32 %s402, 1
          %s1715 = scalar_lea.sflag [#allocation8], %s1714
          %s1716 = sand.u32 %s402, 1
          %s1717 = smul.addr %s1716, 8
          %s1718 = scalar_lea.vmem [#allocation7], %s1717
          %1720 = dma.done %s1715, 128
        $region108: #{tpu_custom_call.1} parent=91 // pred_fallthru
          _
      $region92: #{tpu_custom_call.1} parent=5 // pred_fallthru
        _
    $region6: #{tpu_custom_call.1} parent=1 // loop_footer
      %s36 = sadd.s32 1, %s32
    $region7: #{tpu_custom_call.1} parent=1 // loop_footer_branch
      %31 = sbr.rel target = $region3
    $region8: #{tpu_custom_call.1} parent=1 // loop_exit
      _
    %1721 = vsyncpa [#allocation3], 1
    %s1722 = scalar_lea.sflag [#allocation3], 1
    %1723 = vsyncpa %s1722, 1
    %1724 = vsyncpa [#allocation5], 1
    %s1725 = scalar_lea.sflag [#allocation5], 1
    %1726 = vsyncpa %s1725, 1
    %1727 = vsyncpa [#allocation8], 1
    %s1728 = scalar_lea.sflag [#allocation8], 1
    %1729 = vsyncpa %s1728, 1

</llo_original>
